<compile_context>
chip_gen: v5e
topology: v5e:2x2
jax: 0.10.0
libtpu: 0.0.40
codegen_flags: <defaults>
</compile_context>

<pallas_src>
import jax
import jax.numpy as jnp
from jax.experimental import pallas as pl
from jax.experimental.pallas import tpu as pltpu


# ----------------------------------------------------------------------------
# Fused ActionGCN forward: one pallas_call for both ConvIter layers.
#   x : (B, H, N, C, h, w)   A : (H, N, N)  (shared across batch)
# ----------------------------------------------------------------------------
def action_gcn(x, A, params, *, batch_block=None, mxu_dtype=jnp.float32):
    B, H, Nn, C, h, w = x.shape
    HC = H * C
    W = w * HC  # merged lane dim: index = j*HC + head*C + c

    if batch_block is None:
        # >=2 parallel grid steps when possible (v7x megacore); caller may pass
        # batch_block=B to run a single bigger step on single-TC chips (v5e/v6e).
        batch_block = B // 2 if (B >= 2 and B % 2 == 0) else 1
    assert B % batch_block == 0
    bb = batch_block
    n_steps = B // bb
    R = bb * Nn  # rows per grid step for the depthwise/pointwise stages

    # ---- host-side prep (tiny tensors only; everything pre-cast once) -------
    # channels-last, lane-merged input: xcl[b, n, i, j*HC + head*C + c] = x[b, head, n, c, i, j]
    xcl = jnp.transpose(x, (0, 2, 4, 5, 1, 3)).reshape(B, Nn, h, W)
    # adjacency expanded along the merged channel axis (shared across batch):
    #   aexp[m, n, j*HC + head*C + c] = A[head, n, m]
    aexp = jnp.tile(
        jnp.repeat(jnp.transpose(A, (2, 1, 0)).astype(jnp.float32), C, axis=-1),
        (1, 1, w),
    )

    def prep(p):
        wdw = jnp.tile(p["wdw"].astype(jnp.float32), (1, 1, w))          # (3, 3, W)
        bdw = jnp.tile(p["bdw"].astype(jnp.float32), (1, w))             # (1, W)
        # Block-diagonal pointwise weight; fine at W=128 (one MXU tile).  If W
        # grows past ~256 restructure to contract over HC instead (scaling guard).
        wpw = jnp.kron(jnp.eye(w, dtype=jnp.float32),
                       p["wpw"].astype(jnp.float32)).astype(mxu_dtype)   # (W, W)
        bpw = jnp.tile(p["bpw"].astype(jnp.float32), (1, w))             # (1, W)
        return wdw, bdw, wpw, bpw

    w1 = prep(params["layer1"])
    w2 = prep(params["layer2"])

    # ---- the fused kernel (one grid step = `bb` batch elements, both layers) ----
    def kernel(x_ref, a_ref, wdw1_ref, bdw1_ref, wpw1_ref, bpw1_ref,
               wdw2_ref, bdw2_ref, wpw2_ref, bpw2_ref, o_ref):
        # Constant A rows: broadcast views built ONCE, reused by both layers.
        a_full = a_ref[...]                                           # (Nn, Nn, W) f32
        a_bcast = [a_full[m][None, :, None, :] for m in range(Nn)]    # (1, Nn, 1, W)

        # Halo masks for the 3x3 depthwise conv, built once from iota.
        row_idx = jax.lax.broadcasted_iota(jnp.int32, (h, W), 0)
        lane_idx = jax.lax.broadcasted_iota(jnp.int32, (h, W), 1)
        m_top = row_idx >= 1               # valid when tap reads row i-1
        m_bot = row_idx < (h - 1)          # valid when tap reads row i+1
        m_left = lane_idx >= HC            # valid when tap reads pixel j-1
        m_right = lane_idx < (W - HC)      # valid when tap reads pixel j+1

        def shift_rows(v, di):             # v: (R, h, W), roll on sublane axis
            if di == 1:
                return v
            if di == 0:
                return jnp.where(m_top, pltpu.roll(v, shift=1, axis=1), 0.0)
            return jnp.where(m_bot, pltpu.roll(v, shift=h - 1, axis=1), 0.0)

        def shift_lanes(v, dj):            # v: (R, h, W), roll on lane axis by HC
            if dj == 1:
                return v
            if dj == 0:
                return jnp.where(m_left, pltpu.roll(v, shift=HC, axis=2), 0.0)
            return jnp.where(m_right, pltpu.roll(v, shift=W - HC, axis=2), 0.0)

        def conv_iter(xcv, wdw, bdw, wpw, bpw):
            # -- node mixing: mixed[b, n] = sum_m A[head, n, m] * xcv[b, m]  (VPU FMAs) --
            mixed = a_bcast[0] * xcv[:, 0][:, None, :, :]
            for m in range(1, Nn):
                mixed = mixed + a_bcast[m] * xcv[:, m][:, None, :, :]
            mixed = mixed.reshape(R, h, W)          # free leading-dim merge

            # -- depthwise 3x3, padding=1: center tap + bias init, then 8 shifted
            #    taps generated just-in-time (only one row / one tap live at once) --
            acc = mixed * wdw[1, 1] + bdw
            for di in range(3):
                xr = shift_rows(mixed, di)
                for dj in range(3):
                    if di == 1 and dj == 1:
                        continue
                    acc = acc + shift_lanes(xr, dj) * wdw[di, dj]

            # -- pointwise 1x1: one batched MXU matmul over all rows of this step --
            y = jnp.dot(acc.reshape(R * h, W).astype(wpw.dtype), wpw,
                        preferred_element_type=jnp.float32)
            y = y + bpw
            return y.reshape(bb, Nn, h, W)

        x0 = x_ref[...].astype(jnp.float32)
        y1 = conv_iter(x0, wdw1_ref[...], bdw1_ref[...], wpw1_ref[...], bpw1_ref[...])
        y2 = conv_iter(y1, wdw2_ref[...], bdw2_ref[...], wpw2_ref[...], bpw2_ref[...])
        o_ref[...] = y2.astype(o_ref.dtype)

    wdw_spec = pl.BlockSpec((3, 3, W), lambda b: (0, 0, 0))
    b_spec = pl.BlockSpec((1, W), lambda b: (0, 0))
    pw_spec = pl.BlockSpec((W, W), lambda b: (0, 0))

    out = pl.pallas_call(
        kernel,
        out_shape=jax.ShapeDtypeStruct((B, Nn, h, W), x.dtype),
        grid=(n_steps,),
        in_specs=[
            pl.BlockSpec((bb, Nn, h, W), lambda b: (b, 0, 0, 0)),     # x (bb batches / step)
            pl.BlockSpec((Nn, Nn, W), lambda b: (0, 0, 0)),           # A (shared)
            wdw_spec, b_spec, pw_spec, b_spec,                        # layer 1 weights
            wdw_spec, b_spec, pw_spec, b_spec,                        # layer 2 weights
        ],
        out_specs=pl.BlockSpec((bb, Nn, h, W), lambda b: (b, 0, 0, 0)),
        compiler_params=pltpu.CompilerParams(dimension_semantics=("parallel",)),
    )(xcl, aexp, *w1, *w2)

    # back to the module's (B, H, N, C, h, w) layout (pure reshape + one transpose)
    out = out.reshape(B, Nn, h, w, H, C)
    return jnp.transpose(out, (0, 4, 1, 5, 2, 3))


# ----------------------------------------------------------------------------
# Pure-JAX reference (runtime correctness check)
# ----------------------------------------------------------------------------
def _ref_sepconv(x_nchw, wdw, bdw, wpw, bpw):
    C = x_nchw.shape[1]
    w_dw = jnp.transpose(wdw, (2, 0, 1))[:, None, :, :]      # (C,1,3,3)
    y = jax.lax.conv_general_dilated(
        x_nchw, w_dw, (1, 1), ((1, 1), (1, 1)),
        feature_group_count=C,
        dimension_numbers=("NCHW", "OIHW", "NCHW"),
    ) + bdw.reshape(1, C, 1, 1)
    w_pw = jnp.transpose(wpw)[:, :, None, None]               # (out,in,1,1)
    z = jax.lax.conv_general_dilated(
        y, w_pw, (1, 1), ((0, 0), (0, 0)),
        dimension_numbers=("NCHW", "OIHW", "NCHW"),
    ) + bpw.reshape(1, C, 1, 1)
    return z


def _ref_conv_iter(x, A, p):
    B, H, N, C, h, w = x.shape
    x = jnp.einsum("bhnm,bhmcij->bhncij", A, x)
    x = jnp.transpose(x, (0, 2, 1, 3, 4, 5)).reshape(B * N, H * C, h, w)
    x = _ref_sepconv(x, p["wdw"], p["bdw"], p["wpw"], p["bpw"])
    x = x.reshape(B, N, H, C, h, w)
    return jnp.transpose(x, (0, 2, 1, 3, 4, 5))


def _ref_action_gcn(x, A, params):
    B = x.shape[0]
    A_b = jnp.broadcast_to(A, (B,) + A.shape)
    x = _ref_conv_iter(x, A_b, params["layer1"])
    x = _ref_conv_iter(x, A_b, params["layer2"])
    return x


# ----------------------------------------------------------------------------
# Deterministic parameter init
# ----------------------------------------------------------------------------
def init_params(key, dim):
    def layer(k):
        k1, k2, k3, k4 = jax.random.split(k, 4)
        return {
            "wdw": 0.1 * jax.random.normal(k1, (3, 3, dim), jnp.float32),
            "bdw": 0.1 * jax.random.normal(k2, (1, dim), jnp.float32),
            "wpw": 0.1 * jax.random.normal(k3, (dim, dim), jnp.float32),
            "bpw": 0.1 * jax.random.normal(k4, (1, dim), jnp.float32),
        }

    ka, kb = jax.random.split(key)
    return {"layer1": layer(ka), "layer2": layer(kb)}


if __name__ == "__main__":
    # Small shapes consistent with the module:
    #   B=2, num_head=2, Nnodes=(T*N+1)=5, C=dim/num_head=8 (dim=16), h=w=8
    #   -> merged lane dim W = w*H*C = 128 (exactly one lane tile, dense stores)
    B, H, Nn, C, h, w = 2, 2, 5, 8, 8, 8
    dim = H * C

    key = jax.random.PRNGKey(0)
    kx, ka, kp = jax.random.split(key, 3)
    x = jax.random.normal(kx, (B, H, Nn, C, h, w), jnp.float32)
    A = jax.nn.softmax(jax.random.normal(ka, (H, Nn, Nn), jnp.float32), axis=-1)
    params = init_params(kp, dim)

    ref = jax.block_until_ready(_ref_action_gcn(x, A, params))

    # Default path: f32 MXU operands, >=2 parallel grid steps (v7x-friendly).
    fwd = jax.jit(lambda x, A, p: action_gcn(x, A, p))
    out = jax.block_until_ready(fwd(x, A, params))
    assert out.shape == (B, H, Nn, C, h, w)
    max_err = float(jnp.max(jnp.abs(out - ref)))
    assert jnp.allclose(out, ref, atol=1e-3, rtol=1e-3), max_err

    # v5e/v6e-oriented path: whole batch in one grid step + bf16 MXU operands
    # (f32 accumulate).  Looser tolerance acknowledges the precision change.
    fwd_bf16 = jax.jit(
        lambda x, A, p: action_gcn(x, A, p, batch_block=B, mxu_dtype=jnp.bfloat16))
    out_bf16 = jax.block_until_ready(fwd_bf16(x, A, params))
    max_err_bf16 = float(jnp.max(jnp.abs(out_bf16 - ref)))
    assert jnp.allclose(out_bf16, ref, atol=1e-2, rtol=1e-2), max_err_bf16

    print("KERNEL_OK")
</pallas_src>

<mosaic_0001>
module attributes {stable_mosaic.version = 11 : i64} {
  func.func @kernel(%arg0: i32, %arg1: memref<1x5x8x128xf32, #tpu.memory_space<vmem>>, %arg2: memref<5x5x128xf32, #tpu.memory_space<vmem>>, %arg3: memref<3x3x128xf32, #tpu.memory_space<vmem>>, %arg4: memref<1x128xf32, #tpu.memory_space<vmem>>, %arg5: memref<128x128xf32, #tpu.memory_space<vmem>>, %arg6: memref<1x128xf32, #tpu.memory_space<vmem>>, %arg7: memref<3x3x128xf32, #tpu.memory_space<vmem>>, %arg8: memref<1x128xf32, #tpu.memory_space<vmem>>, %arg9: memref<128x128xf32, #tpu.memory_space<vmem>>, %arg10: memref<1x128xf32, #tpu.memory_space<vmem>>, %arg11: memref<1x5x8x128xf32, #tpu.memory_space<vmem>>) attributes {dimension_semantics = [#tpu.dimension_semantics<parallel>], iteration_bounds = array<i64: 2>, scalar_prefetch = 0 : i64, scratch_operands = 0 : i64, tpu.core_type = #tpu.core_type<tc>, window_params = [{transform_indices = @transform_0, window_bounds = array<i64: 1, 5, 8, 128>}, {pipeline_mode = #tpu.pipeline_mode<synchronous>, transform_indices = @transform_1, window_bounds = array<i64: 5, 5, 128>}, {pipeline_mode = #tpu.pipeline_mode<synchronous>, transform_indices = @transform_2, window_bounds = array<i64: 3, 3, 128>}, {pipeline_mode = #tpu.pipeline_mode<synchronous>, transform_indices = @transform_3, window_bounds = array<i64: 1, 128>}, {pipeline_mode = #tpu.pipeline_mode<synchronous>, transform_indices = @transform_4, window_bounds = array<i64: 128, 128>}, {pipeline_mode = #tpu.pipeline_mode<synchronous>, transform_indices = @transform_5, window_bounds = array<i64: 1, 128>}, {pipeline_mode = #tpu.pipeline_mode<synchronous>, transform_indices = @transform_6, window_bounds = array<i64: 3, 3, 128>}, {pipeline_mode = #tpu.pipeline_mode<synchronous>, transform_indices = @transform_7, window_bounds = array<i64: 1, 128>}, {pipeline_mode = #tpu.pipeline_mode<synchronous>, transform_indices = @transform_8, window_bounds = array<i64: 128, 128>}, {pipeline_mode = #tpu.pipeline_mode<synchronous>, transform_indices = @transform_9, window_bounds = array<i64: 1, 128>}, {transform_indices = @transform_10, window_bounds = array<i64: 1, 5, 8, 128>}]} {
    %c0 = arith.constant 0 : index
    %c0_0 = arith.constant 0 : index
    %c0_1 = arith.constant 0 : index
    %0 = vector.load %arg2[%c0, %c0_0, %c0_1] : memref<5x5x128xf32, #tpu.memory_space<vmem>>, vector<5x5x128xf32>
    %1 = vector.extract_strided_slice %0 {offsets = [0, 0, 0], sizes = [1, 5, 128], strides = [1, 1, 1]} : vector<5x5x128xf32> to vector<1x5x128xf32>
    %2 = vector.shape_cast %1 : vector<1x5x128xf32> to vector<5x128xf32>
    %3 = vector.shape_cast %2 : vector<5x128xf32> to vector<1x5x1x128xf32>
    %4 = vector.extract_strided_slice %0 {offsets = [1, 0, 0], sizes = [1, 5, 128], strides = [1, 1, 1]} : vector<5x5x128xf32> to vector<1x5x128xf32>
    %5 = vector.shape_cast %4 : vector<1x5x128xf32> to vector<5x128xf32>
    %6 = vector.shape_cast %5 : vector<5x128xf32> to vector<1x5x1x128xf32>
    %7 = vector.extract_strided_slice %0 {offsets = [2, 0, 0], sizes = [1, 5, 128], strides = [1, 1, 1]} : vector<5x5x128xf32> to vector<1x5x128xf32>
    %8 = vector.shape_cast %7 : vector<1x5x128xf32> to vector<5x128xf32>
    %9 = vector.shape_cast %8 : vector<5x128xf32> to vector<1x5x1x128xf32>
    %10 = vector.extract_strided_slice %0 {offsets = [3, 0, 0], sizes = [1, 5, 128], strides = [1, 1, 1]} : vector<5x5x128xf32> to vector<1x5x128xf32>
    %11 = vector.shape_cast %10 : vector<1x5x128xf32> to vector<5x128xf32>
    %12 = vector.shape_cast %11 : vector<5x128xf32> to vector<1x5x1x128xf32>
    %13 = vector.extract_strided_slice %0 {offsets = [4, 0, 0], sizes = [1, 5, 128], strides = [1, 1, 1]} : vector<5x5x128xf32> to vector<1x5x128xf32>
    %14 = vector.shape_cast %13 : vector<1x5x128xf32> to vector<5x128xf32>
    %15 = vector.shape_cast %14 : vector<5x128xf32> to vector<1x5x1x128xf32>
    %16 = tpu.iota {dimensions = array<i32: 0>} : vector<8x128xi32>
    %17 = tpu.iota {dimensions = array<i32: 1>} : vector<8x128xi32>
    %c1_i32 = arith.constant 1 : i32
    %18 = vector.broadcast %c1_i32 : i32 to vector<8x128xi32>
    %19 = arith.cmpi sge, %16, %18 : vector<8x128xi32>
    %c7_i32 = arith.constant 7 : i32
    %20 = vector.broadcast %c7_i32 : i32 to vector<8x128xi32>
    %21 = arith.cmpi slt, %16, %20 : vector<8x128xi32>
    %c16_i32 = arith.constant 16 : i32
    %22 = vector.broadcast %c16_i32 : i32 to vector<8x128xi32>
    %23 = arith.cmpi sge, %17, %22 : vector<8x128xi32>
    %c112_i32 = arith.constant 112 : i32
    %24 = vector.broadcast %c112_i32 : i32 to vector<8x128xi32>
    %25 = arith.cmpi slt, %17, %24 : vector<8x128xi32>
    %c0_2 = arith.constant 0 : index
    %c0_3 = arith.constant 0 : index
    %c0_4 = arith.constant 0 : index
    %c0_5 = arith.constant 0 : index
    %26 = vector.load %arg1[%c0_2, %c0_3, %c0_4, %c0_5] : memref<1x5x8x128xf32, #tpu.memory_space<vmem>>, vector<1x5x8x128xf32>
    %c0_6 = arith.constant 0 : index
    %c0_7 = arith.constant 0 : index
    %c0_8 = arith.constant 0 : index
    %27 = vector.load %arg3[%c0_6, %c0_7, %c0_8] : memref<3x3x128xf32, #tpu.memory_space<vmem>>, vector<3x3x128xf32>
    %c0_9 = arith.constant 0 : index
    %c0_10 = arith.constant 0 : index
    %28 = vector.load %arg4[%c0_9, %c0_10] : memref<1x128xf32, #tpu.memory_space<vmem>>, vector<1x128xf32>
    %c0_11 = arith.constant 0 : index
    %c0_12 = arith.constant 0 : index
    %29 = vector.load %arg5[%c0_11, %c0_12] : memref<128x128xf32, #tpu.memory_space<vmem>>, vector<128x128xf32>
    %c0_13 = arith.constant 0 : index
    %c0_14 = arith.constant 0 : index
    %30 = vector.load %arg6[%c0_13, %c0_14] : memref<1x128xf32, #tpu.memory_space<vmem>>, vector<1x128xf32>
    %31 = vector.extract_strided_slice %26 {offsets = [0, 0, 0, 0], sizes = [1, 1, 8, 128], strides = [1, 1, 1, 1]} : vector<1x5x8x128xf32> to vector<1x1x8x128xf32>
    %32 = vector.shape_cast %31 : vector<1x1x8x128xf32> to vector<1x8x128xf32>
    %33 = vector.shape_cast %32 : vector<1x8x128xf32> to vector<1x1x8x128xf32>
    %34 = vector.broadcast %3 : vector<1x5x1x128xf32> to vector<1x5x8x128xf32>
    %35 = vector.broadcast %33 : vector<1x1x8x128xf32> to vector<1x5x8x128xf32>
    %36 = arith.mulf %34, %35 : vector<1x5x8x128xf32>
    %37 = vector.extract_strided_slice %26 {offsets = [0, 1, 0, 0], sizes = [1, 1, 8, 128], strides = [1, 1, 1, 1]} : vector<1x5x8x128xf32> to vector<1x1x8x128xf32>
    %38 = vector.shape_cast %37 : vector<1x1x8x128xf32> to vector<1x8x128xf32>
    %39 = vector.shape_cast %38 : vector<1x8x128xf32> to vector<1x1x8x128xf32>
    %40 = vector.broadcast %6 : vector<1x5x1x128xf32> to vector<1x5x8x128xf32>
    %41 = vector.broadcast %39 : vector<1x1x8x128xf32> to vector<1x5x8x128xf32>
    %42 = arith.mulf %40, %41 : vector<1x5x8x128xf32>
    %43 = arith.addf %36, %42 : vector<1x5x8x128xf32>
    %44 = vector.extract_strided_slice %26 {offsets = [0, 2, 0, 0], sizes = [1, 1, 8, 128], strides = [1, 1, 1, 1]} : vector<1x5x8x128xf32> to vector<1x1x8x128xf32>
    %45 = vector.shape_cast %44 : vector<1x1x8x128xf32> to vector<1x8x128xf32>
    %46 = vector.shape_cast %45 : vector<1x8x128xf32> to vector<1x1x8x128xf32>
    %47 = vector.broadcast %9 : vector<1x5x1x128xf32> to vector<1x5x8x128xf32>
    %48 = vector.broadcast %46 : vector<1x1x8x128xf32> to vector<1x5x8x128xf32>
    %49 = arith.mulf %47, %48 : vector<1x5x8x128xf32>
    %50 = arith.addf %43, %49 : vector<1x5x8x128xf32>
    %51 = vector.extract_strided_slice %26 {offsets = [0, 3, 0, 0], sizes = [1, 1, 8, 128], strides = [1, 1, 1, 1]} : vector<1x5x8x128xf32> to vector<1x1x8x128xf32>
    %52 = vector.shape_cast %51 : vector<1x1x8x128xf32> to vector<1x8x128xf32>
    %53 = vector.shape_cast %52 : vector<1x8x128xf32> to vector<1x1x8x128xf32>
    %54 = vector.broadcast %12 : vector<1x5x1x128xf32> to vector<1x5x8x128xf32>
    %55 = vector.broadcast %53 : vector<1x1x8x128xf32> to vector<1x5x8x128xf32>
    %56 = arith.mulf %54, %55 : vector<1x5x8x128xf32>
    %57 = arith.addf %50, %56 : vector<1x5x8x128xf32>
    %58 = vector.extract_strided_slice %26 {offsets = [0, 4, 0, 0], sizes = [1, 1, 8, 128], strides = [1, 1, 1, 1]} : vector<1x5x8x128xf32> to vector<1x1x8x128xf32>
    %59 = vector.shape_cast %58 : vector<1x1x8x128xf32> to vector<1x8x128xf32>
    %60 = vector.shape_cast %59 : vector<1x8x128xf32> to vector<1x1x8x128xf32>
    %61 = vector.broadcast %15 : vector<1x5x1x128xf32> to vector<1x5x8x128xf32>
    %62 = vector.broadcast %60 : vector<1x1x8x128xf32> to vector<1x5x8x128xf32>
    %63 = arith.mulf %61, %62 : vector<1x5x8x128xf32>
    %64 = arith.addf %57, %63 : vector<1x5x8x128xf32>
    %65 = vector.shape_cast %64 : vector<1x5x8x128xf32> to vector<5x8x128xf32>
    %66 = vector.extract_strided_slice %27 {offsets = [1, 1, 0], sizes = [1, 1, 128], strides = [1, 1, 1]} : vector<3x3x128xf32> to vector<1x1x128xf32>
    %67 = vector.shape_cast %66 : vector<1x1x128xf32> to vector<128xf32>
    %68 = vector.shape_cast %67 : vector<128xf32> to vector<1x1x128xf32>
    %69 = vector.broadcast %68 : vector<1x1x128xf32> to vector<5x8x128xf32>
    %70 = arith.mulf %65, %69 : vector<5x8x128xf32>
    %71 = vector.shape_cast %28 : vector<1x128xf32> to vector<1x1x128xf32>
    %72 = vector.broadcast %71 : vector<1x1x128xf32> to vector<5x8x128xf32>
    %73 = arith.addf %70, %72 : vector<5x8x128xf32>
    %c1_i32_15 = arith.constant 1 : i32
    %74 = tpu.dynamic_rotate %65 by %c1_i32_15 dim 1 : vector<5x8x128xf32>, i32 -> vector<5x8x128xf32>
    %cst = arith.constant 0.000000e+00 : f32
    %75 = vector.shape_cast %19 : vector<8x128xi1> to vector<1x8x128xi1>
    %76 = vector.broadcast %75 : vector<1x8x128xi1> to vector<5x8x128xi1>
    %77 = vector.broadcast %cst : f32 to vector<5x8x128xf32>
    %78 = arith.select %76, %74, %77 : vector<5x8x128xi1>, vector<5x8x128xf32>
    %c16_i32_16 = arith.constant 16 : i32
    %79 = tpu.dynamic_rotate %78 by %c16_i32_16 dim 2 : vector<5x8x128xf32>, i32 -> vector<5x8x128xf32>
    %cst_17 = arith.constant 0.000000e+00 : f32
    %80 = vector.shape_cast %23 : vector<8x128xi1> to vector<1x8x128xi1>
    %81 = vector.broadcast %80 : vector<1x8x128xi1> to vector<5x8x128xi1>
    %82 = vector.broadcast %cst_17 : f32 to vector<5x8x128xf32>
    %83 = arith.select %81, %79, %82 : vector<5x8x128xi1>, vector<5x8x128xf32>
    %84 = vector.extract_strided_slice %27 {offsets = [0, 0, 0], sizes = [1, 1, 128], strides = [1, 1, 1]} : vector<3x3x128xf32> to vector<1x1x128xf32>
    %85 = vector.shape_cast %84 : vector<1x1x128xf32> to vector<128xf32>
    %86 = vector.shape_cast %85 : vector<128xf32> to vector<1x1x128xf32>
    %87 = vector.broadcast %86 : vector<1x1x128xf32> to vector<5x8x128xf32>
    %88 = arith.mulf %83, %87 : vector<5x8x128xf32>
    %89 = arith.addf %73, %88 : vector<5x8x128xf32>
    %90 = vector.extract_strided_slice %27 {offsets = [0, 1, 0], sizes = [1, 1, 128], strides = [1, 1, 1]} : vector<3x3x128xf32> to vector<1x1x128xf32>
    %91 = vector.shape_cast %90 : vector<1x1x128xf32> to vector<128xf32>
    %92 = vector.shape_cast %91 : vector<128xf32> to vector<1x1x128xf32>
    %93 = vector.broadcast %92 : vector<1x1x128xf32> to vector<5x8x128xf32>
    %94 = arith.mulf %78, %93 : vector<5x8x128xf32>
    %95 = arith.addf %89, %94 : vector<5x8x128xf32>
    %c112_i32_18 = arith.constant 112 : i32
    %96 = tpu.dynamic_rotate %78 by %c112_i32_18 dim 2 : vector<5x8x128xf32>, i32 -> vector<5x8x128xf32>
    %cst_19 = arith.constant 0.000000e+00 : f32
    %97 = vector.shape_cast %25 : vector<8x128xi1> to vector<1x8x128xi1>
    %98 = vector.broadcast %97 : vector<1x8x128xi1> to vector<5x8x128xi1>
    %99 = vector.broadcast %cst_19 : f32 to vector<5x8x128xf32>
    %100 = arith.select %98, %96, %99 : vector<5x8x128xi1>, vector<5x8x128xf32>
    %101 = vector.extract_strided_slice %27 {offsets = [0, 2, 0], sizes = [1, 1, 128], strides = [1, 1, 1]} : vector<3x3x128xf32> to vector<1x1x128xf32>
    %102 = vector.shape_cast %101 : vector<1x1x128xf32> to vector<128xf32>
    %103 = vector.shape_cast %102 : vector<128xf32> to vector<1x1x128xf32>
    %104 = vector.broadcast %103 : vector<1x1x128xf32> to vector<5x8x128xf32>
    %105 = arith.mulf %100, %104 : vector<5x8x128xf32>
    %106 = arith.addf %95, %105 : vector<5x8x128xf32>
    %c16_i32_20 = arith.constant 16 : i32
    %107 = tpu.dynamic_rotate %65 by %c16_i32_20 dim 2 : vector<5x8x128xf32>, i32 -> vector<5x8x128xf32>
    %cst_21 = arith.constant 0.000000e+00 : f32
    %108 = vector.shape_cast %23 : vector<8x128xi1> to vector<1x8x128xi1>
    %109 = vector.broadcast %108 : vector<1x8x128xi1> to vector<5x8x128xi1>
    %110 = vector.broadcast %cst_21 : f32 to vector<5x8x128xf32>
    %111 = arith.select %109, %107, %110 : vector<5x8x128xi1>, vector<5x8x128xf32>
    %112 = vector.extract_strided_slice %27 {offsets = [1, 0, 0], sizes = [1, 1, 128], strides = [1, 1, 1]} : vector<3x3x128xf32> to vector<1x1x128xf32>
    %113 = vector.shape_cast %112 : vector<1x1x128xf32> to vector<128xf32>
    %114 = vector.shape_cast %113 : vector<128xf32> to vector<1x1x128xf32>
    %115 = vector.broadcast %114 : vector<1x1x128xf32> to vector<5x8x128xf32>
    %116 = arith.mulf %111, %115 : vector<5x8x128xf32>
    %117 = arith.addf %106, %116 : vector<5x8x128xf32>
    %c112_i32_22 = arith.constant 112 : i32
    %118 = tpu.dynamic_rotate %65 by %c112_i32_22 dim 2 : vector<5x8x128xf32>, i32 -> vector<5x8x128xf32>
    %cst_23 = arith.constant 0.000000e+00 : f32
    %119 = vector.shape_cast %25 : vector<8x128xi1> to vector<1x8x128xi1>
    %120 = vector.broadcast %119 : vector<1x8x128xi1> to vector<5x8x128xi1>
    %121 = vector.broadcast %cst_23 : f32 to vector<5x8x128xf32>
    %122 = arith.select %120, %118, %121 : vector<5x8x128xi1>, vector<5x8x128xf32>
    %123 = vector.extract_strided_slice %27 {offsets = [1, 2, 0], sizes = [1, 1, 128], strides = [1, 1, 1]} : vector<3x3x128xf32> to vector<1x1x128xf32>
    %124 = vector.shape_cast %123 : vector<1x1x128xf32> to vector<128xf32>
    %125 = vector.shape_cast %124 : vector<128xf32> to vector<1x1x128xf32>
    %126 = vector.broadcast %125 : vector<1x1x128xf32> to vector<5x8x128xf32>
    %127 = arith.mulf %122, %126 : vector<5x8x128xf32>
    %128 = arith.addf %117, %127 : vector<5x8x128xf32>
    %c7_i32_24 = arith.constant 7 : i32
    %129 = tpu.dynamic_rotate %65 by %c7_i32_24 dim 1 : vector<5x8x128xf32>, i32 -> vector<5x8x128xf32>
    %cst_25 = arith.constant 0.000000e+00 : f32
    %130 = vector.shape_cast %21 : vector<8x128xi1> to vector<1x8x128xi1>
    %131 = vector.broadcast %130 : vector<1x8x128xi1> to vector<5x8x128xi1>
    %132 = vector.broadcast %cst_25 : f32 to vector<5x8x128xf32>
    %133 = arith.select %131, %129, %132 : vector<5x8x128xi1>, vector<5x8x128xf32>
    %c16_i32_26 = arith.constant 16 : i32
    %134 = tpu.dynamic_rotate %133 by %c16_i32_26 dim 2 : vector<5x8x128xf32>, i32 -> vector<5x8x128xf32>
    %cst_27 = arith.constant 0.000000e+00 : f32
    %135 = vector.shape_cast %23 : vector<8x128xi1> to vector<1x8x128xi1>
    %136 = vector.broadcast %135 : vector<1x8x128xi1> to vector<5x8x128xi1>
    %137 = vector.broadcast %cst_27 : f32 to vector<5x8x128xf32>
    %138 = arith.select %136, %134, %137 : vector<5x8x128xi1>, vector<5x8x128xf32>
    %139 = vector.extract_strided_slice %27 {offsets = [2, 0, 0], sizes = [1, 1, 128], strides = [1, 1, 1]} : vector<3x3x128xf32> to vector<1x1x128xf32>
    %140 = vector.shape_cast %139 : vector<1x1x128xf32> to vector<128xf32>
    %141 = vector.shape_cast %140 : vector<128xf32> to vector<1x1x128xf32>
    %142 = vector.broadcast %141 : vector<1x1x128xf32> to vector<5x8x128xf32>
    %143 = arith.mulf %138, %142 : vector<5x8x128xf32>
    %144 = arith.addf %128, %143 : vector<5x8x128xf32>
    %145 = vector.extract_strided_slice %27 {offsets = [2, 1, 0], sizes = [1, 1, 128], strides = [1, 1, 1]} : vector<3x3x128xf32> to vector<1x1x128xf32>
    %146 = vector.shape_cast %145 : vector<1x1x128xf32> to vector<128xf32>
    %147 = vector.shape_cast %146 : vector<128xf32> to vector<1x1x128xf32>
    %148 = vector.broadcast %147 : vector<1x1x128xf32> to vector<5x8x128xf32>
    %149 = arith.mulf %133, %148 : vector<5x8x128xf32>
    %150 = arith.addf %144, %149 : vector<5x8x128xf32>
    %c112_i32_28 = arith.constant 112 : i32
    %151 = tpu.dynamic_rotate %133 by %c112_i32_28 dim 2 : vector<5x8x128xf32>, i32 -> vector<5x8x128xf32>
    %cst_29 = arith.constant 0.000000e+00 : f32
    %152 = vector.shape_cast %25 : vector<8x128xi1> to vector<1x8x128xi1>
    %153 = vector.broadcast %152 : vector<1x8x128xi1> to vector<5x8x128xi1>
    %154 = vector.broadcast %cst_29 : f32 to vector<5x8x128xf32>
    %155 = arith.select %153, %151, %154 : vector<5x8x128xi1>, vector<5x8x128xf32>
    %156 = vector.extract_strided_slice %27 {offsets = [2, 2, 0], sizes = [1, 1, 128], strides = [1, 1, 1]} : vector<3x3x128xf32> to vector<1x1x128xf32>
    %157 = vector.shape_cast %156 : vector<1x1x128xf32> to vector<128xf32>
    %158 = vector.shape_cast %157 : vector<128xf32> to vector<1x1x128xf32>
    %159 = vector.broadcast %158 : vector<1x1x128xf32> to vector<5x8x128xf32>
    %160 = arith.mulf %155, %159 : vector<5x8x128xf32>
    %161 = arith.addf %150, %160 : vector<5x8x128xf32>
    %162 = vector.shape_cast %161 : vector<5x8x128xf32> to vector<40x128xf32>
    %cst_30 = arith.constant dense<0.000000e+00> : vector<40x128xf32>
    %163 = tpu.matmul %162, %29, %cst_30 {dimension_numbers = #tpu.dot_dimension_numbers<[1], [0], [0], [1], [0, 0, 1, 1], [], []>} : vector<40x128xf32>, vector<128x128xf32>, vector<40x128xf32> -> vector<40x128xf32>
    %164 = vector.broadcast %30 : vector<1x128xf32> to vector<40x128xf32>
    %165 = arith.addf %163, %164 : vector<40x128xf32>
    %166 = vector.shape_cast %165 : vector<40x128xf32> to vector<1x5x8x128xf32>
    %c0_31 = arith.constant 0 : index
    %c0_32 = arith.constant 0 : index
    %c0_33 = arith.constant 0 : index
    %167 = vector.load %arg7[%c0_31, %c0_32, %c0_33] : memref<3x3x128xf32, #tpu.memory_space<vmem>>, vector<3x3x128xf32>
    %c0_34 = arith.constant 0 : index
    %c0_35 = arith.constant 0 : index
    %168 = vector.load %arg8[%c0_34, %c0_35] : memref<1x128xf32, #tpu.memory_space<vmem>>, vector<1x128xf32>
    %c0_36 = arith.constant 0 : index
    %c0_37 = arith.constant 0 : index
    %169 = vector.load %arg9[%c0_36, %c0_37] : memref<128x128xf32, #tpu.memory_space<vmem>>, vector<128x128xf32>
    %c0_38 = arith.constant 0 : index
    %c0_39 = arith.constant 0 : index
    %170 = vector.load %arg10[%c0_38, %c0_39] : memref<1x128xf32, #tpu.memory_space<vmem>>, vector<1x128xf32>
    %171 = vector.extract_strided_slice %166 {offsets = [0, 0, 0, 0], sizes = [1, 1, 8, 128], strides = [1, 1, 1, 1]} : vector<1x5x8x128xf32> to vector<1x1x8x128xf32>
    %172 = vector.shape_cast %171 : vector<1x1x8x128xf32> to vector<1x8x128xf32>
    %173 = vector.shape_cast %172 : vector<1x8x128xf32> to vector<1x1x8x128xf32>
    %174 = vector.broadcast %3 : vector<1x5x1x128xf32> to vector<1x5x8x128xf32>
    %175 = vector.broadcast %173 : vector<1x1x8x128xf32> to vector<1x5x8x128xf32>
    %176 = arith.mulf %174, %175 : vector<1x5x8x128xf32>
    %177 = vector.extract_strided_slice %166 {offsets = [0, 1, 0, 0], sizes = [1, 1, 8, 128], strides = [1, 1, 1, 1]} : vector<1x5x8x128xf32> to vector<1x1x8x128xf32>
    %178 = vector.shape_cast %177 : vector<1x1x8x128xf32> to vector<1x8x128xf32>
    %179 = vector.shape_cast %178 : vector<1x8x128xf32> to vector<1x1x8x128xf32>
    %180 = vector.broadcast %6 : vector<1x5x1x128xf32> to vector<1x5x8x128xf32>
    %181 = vector.broadcast %179 : vector<1x1x8x128xf32> to vector<1x5x8x128xf32>
    %182 = arith.mulf %180, %181 : vector<1x5x8x128xf32>
    %183 = arith.addf %176, %182 : vector<1x5x8x128xf32>
    %184 = vector.extract_strided_slice %166 {offsets = [0, 2, 0, 0], sizes = [1, 1, 8, 128], strides = [1, 1, 1, 1]} : vector<1x5x8x128xf32> to vector<1x1x8x128xf32>
    %185 = vector.shape_cast %184 : vector<1x1x8x128xf32> to vector<1x8x128xf32>
    %186 = vector.shape_cast %185 : vector<1x8x128xf32> to vector<1x1x8x128xf32>
    %187 = vector.broadcast %9 : vector<1x5x1x128xf32> to vector<1x5x8x128xf32>
    %188 = vector.broadcast %186 : vector<1x1x8x128xf32> to vector<1x5x8x128xf32>
    %189 = arith.mulf %187, %188 : vector<1x5x8x128xf32>
    %190 = arith.addf %183, %189 : vector<1x5x8x128xf32>
    %191 = vector.extract_strided_slice %166 {offsets = [0, 3, 0, 0], sizes = [1, 1, 8, 128], strides = [1, 1, 1, 1]} : vector<1x5x8x128xf32> to vector<1x1x8x128xf32>
    %192 = vector.shape_cast %191 : vector<1x1x8x128xf32> to vector<1x8x128xf32>
    %193 = vector.shape_cast %192 : vector<1x8x128xf32> to vector<1x1x8x128xf32>
    %194 = vector.broadcast %12 : vector<1x5x1x128xf32> to vector<1x5x8x128xf32>
    %195 = vector.broadcast %193 : vector<1x1x8x128xf32> to vector<1x5x8x128xf32>
    %196 = arith.mulf %194, %195 : vector<1x5x8x128xf32>
    %197 = arith.addf %190, %196 : vector<1x5x8x128xf32>
    %198 = vector.extract_strided_slice %166 {offsets = [0, 4, 0, 0], sizes = [1, 1, 8, 128], strides = [1, 1, 1, 1]} : vector<1x5x8x128xf32> to vector<1x1x8x128xf32>
    %199 = vector.shape_cast %198 : vector<1x1x8x128xf32> to vector<1x8x128xf32>
    %200 = vector.shape_cast %199 : vector<1x8x128xf32> to vector<1x1x8x128xf32>
    %201 = vector.broadcast %15 : vector<1x5x1x128xf32> to vector<1x5x8x128xf32>
    %202 = vector.broadcast %200 : vector<1x1x8x128xf32> to vector<1x5x8x128xf32>
    %203 = arith.mulf %201, %202 : vector<1x5x8x128xf32>
    %204 = arith.addf %197, %203 : vector<1x5x8x128xf32>
    %205 = vector.shape_cast %204 : vector<1x5x8x128xf32> to vector<5x8x128xf32>
    %206 = vector.extract_strided_slice %167 {offsets = [1, 1, 0], sizes = [1, 1, 128], strides = [1, 1, 1]} : vector<3x3x128xf32> to vector<1x1x128xf32>
    %207 = vector.shape_cast %206 : vector<1x1x128xf32> to vector<128xf32>
    %208 = vector.shape_cast %207 : vector<128xf32> to vector<1x1x128xf32>
    %209 = vector.broadcast %208 : vector<1x1x128xf32> to vector<5x8x128xf32>
    %210 = arith.mulf %205, %209 : vector<5x8x128xf32>
    %211 = vector.shape_cast %168 : vector<1x128xf32> to vector<1x1x128xf32>
    %212 = vector.broadcast %211 : vector<1x1x128xf32> to vector<5x8x128xf32>
    %213 = arith.addf %210, %212 : vector<5x8x128xf32>
    %c1_i32_40 = arith.constant 1 : i32
    %214 = tpu.dynamic_rotate %205 by %c1_i32_40 dim 1 : vector<5x8x128xf32>, i32 -> vector<5x8x128xf32>
    %cst_41 = arith.constant 0.000000e+00 : f32
    %215 = vector.shape_cast %19 : vector<8x128xi1> to vector<1x8x128xi1>
    %216 = vector.broadcast %215 : vector<1x8x128xi1> to vector<5x8x128xi1>
    %217 = vector.broadcast %cst_41 : f32 to vector<5x8x128xf32>
    %218 = arith.select %216, %214, %217 : vector<5x8x128xi1>, vector<5x8x128xf32>
    %c16_i32_42 = arith.constant 16 : i32
    %219 = tpu.dynamic_rotate %218 by %c16_i32_42 dim 2 : vector<5x8x128xf32>, i32 -> vector<5x8x128xf32>
    %cst_43 = arith.constant 0.000000e+00 : f32
    %220 = vector.shape_cast %23 : vector<8x128xi1> to vector<1x8x128xi1>
    %221 = vector.broadcast %220 : vector<1x8x128xi1> to vector<5x8x128xi1>
    %222 = vector.broadcast %cst_43 : f32 to vector<5x8x128xf32>
    %223 = arith.select %221, %219, %222 : vector<5x8x128xi1>, vector<5x8x128xf32>
    %224 = vector.extract_strided_slice %167 {offsets = [0, 0, 0], sizes = [1, 1, 128], strides = [1, 1, 1]} : vector<3x3x128xf32> to vector<1x1x128xf32>
    %225 = vector.shape_cast %224 : vector<1x1x128xf32> to vector<128xf32>
    %226 = vector.shape_cast %225 : vector<128xf32> to vector<1x1x128xf32>
    %227 = vector.broadcast %226 : vector<1x1x128xf32> to vector<5x8x128xf32>
    %228 = arith.mulf %223, %227 : vector<5x8x128xf32>
    %229 = arith.addf %213, %228 : vector<5x8x128xf32>
    %230 = vector.extract_strided_slice %167 {offsets = [0, 1, 0], sizes = [1, 1, 128], strides = [1, 1, 1]} : vector<3x3x128xf32> to vector<1x1x128xf32>
    %231 = vector.shape_cast %230 : vector<1x1x128xf32> to vector<128xf32>
    %232 = vector.shape_cast %231 : vector<128xf32> to vector<1x1x128xf32>
    %233 = vector.broadcast %232 : vector<1x1x128xf32> to vector<5x8x128xf32>
    %234 = arith.mulf %218, %233 : vector<5x8x128xf32>
    %235 = arith.addf %229, %234 : vector<5x8x128xf32>
    %c112_i32_44 = arith.constant 112 : i32
    %236 = tpu.dynamic_rotate %218 by %c112_i32_44 dim 2 : vector<5x8x128xf32>, i32 -> vector<5x8x128xf32>
    %cst_45 = arith.constant 0.000000e+00 : f32
    %237 = vector.shape_cast %25 : vector<8x128xi1> to vector<1x8x128xi1>
    %238 = vector.broadcast %237 : vector<1x8x128xi1> to vector<5x8x128xi1>
    %239 = vector.broadcast %cst_45 : f32 to vector<5x8x128xf32>
    %240 = arith.select %238, %236, %239 : vector<5x8x128xi1>, vector<5x8x128xf32>
    %241 = vector.extract_strided_slice %167 {offsets = [0, 2, 0], sizes = [1, 1, 128], strides = [1, 1, 1]} : vector<3x3x128xf32> to vector<1x1x128xf32>
    %242 = vector.shape_cast %241 : vector<1x1x128xf32> to vector<128xf32>
    %243 = vector.shape_cast %242 : vector<128xf32> to vector<1x1x128xf32>
    %244 = vector.broadcast %243 : vector<1x1x128xf32> to vector<5x8x128xf32>
    %245 = arith.mulf %240, %244 : vector<5x8x128xf32>
    %246 = arith.addf %235, %245 : vector<5x8x128xf32>
    %c16_i32_46 = arith.constant 16 : i32
    %247 = tpu.dynamic_rotate %205 by %c16_i32_46 dim 2 : vector<5x8x128xf32>, i32 -> vector<5x8x128xf32>
    %cst_47 = arith.constant 0.000000e+00 : f32
    %248 = vector.shape_cast %23 : vector<8x128xi1> to vector<1x8x128xi1>
    %249 = vector.broadcast %248 : vector<1x8x128xi1> to vector<5x8x128xi1>
    %250 = vector.broadcast %cst_47 : f32 to vector<5x8x128xf32>
    %251 = arith.select %249, %247, %250 : vector<5x8x128xi1>, vector<5x8x128xf32>
    %252 = vector.extract_strided_slice %167 {offsets = [1, 0, 0], sizes = [1, 1, 128], strides = [1, 1, 1]} : vector<3x3x128xf32> to vector<1x1x128xf32>
    %253 = vector.shape_cast %252 : vector<1x1x128xf32> to vector<128xf32>
    %254 = vector.shape_cast %253 : vector<128xf32> to vector<1x1x128xf32>
    %255 = vector.broadcast %254 : vector<1x1x128xf32> to vector<5x8x128xf32>
    %256 = arith.mulf %251, %255 : vector<5x8x128xf32>
    %257 = arith.addf %246, %256 : vector<5x8x128xf32>
    %c112_i32_48 = arith.constant 112 : i32
    %258 = tpu.dynamic_rotate %205 by %c112_i32_48 dim 2 : vector<5x8x128xf32>, i32 -> vector<5x8x128xf32>
    %cst_49 = arith.constant 0.000000e+00 : f32
    %259 = vector.shape_cast %25 : vector<8x128xi1> to vector<1x8x128xi1>
    %260 = vector.broadcast %259 : vector<1x8x128xi1> to vector<5x8x128xi1>
    %261 = vector.broadcast %cst_49 : f32 to vector<5x8x128xf32>
    %262 = arith.select %260, %258, %261 : vector<5x8x128xi1>, vector<5x8x128xf32>
    %263 = vector.extract_strided_slice %167 {offsets = [1, 2, 0], sizes = [1, 1, 128], strides = [1, 1, 1]} : vector<3x3x128xf32> to vector<1x1x128xf32>
    %264 = vector.shape_cast %263 : vector<1x1x128xf32> to vector<128xf32>
    %265 = vector.shape_cast %264 : vector<128xf32> to vector<1x1x128xf32>
    %266 = vector.broadcast %265 : vector<1x1x128xf32> to vector<5x8x128xf32>
    %267 = arith.mulf %262, %266 : vector<5x8x128xf32>
    %268 = arith.addf %257, %267 : vector<5x8x128xf32>
    %c7_i32_50 = arith.constant 7 : i32
    %269 = tpu.dynamic_rotate %205 by %c7_i32_50 dim 1 : vector<5x8x128xf32>, i32 -> vector<5x8x128xf32>
    %cst_51 = arith.constant 0.000000e+00 : f32
    %270 = vector.shape_cast %21 : vector<8x128xi1> to vector<1x8x128xi1>
    %271 = vector.broadcast %270 : vector<1x8x128xi1> to vector<5x8x128xi1>
    %272 = vector.broadcast %cst_51 : f32 to vector<5x8x128xf32>
    %273 = arith.select %271, %269, %272 : vector<5x8x128xi1>, vector<5x8x128xf32>
    %c16_i32_52 = arith.constant 16 : i32
    %274 = tpu.dynamic_rotate %273 by %c16_i32_52 dim 2 : vector<5x8x128xf32>, i32 -> vector<5x8x128xf32>
    %cst_53 = arith.constant 0.000000e+00 : f32
    %275 = vector.shape_cast %23 : vector<8x128xi1> to vector<1x8x128xi1>
    %276 = vector.broadcast %275 : vector<1x8x128xi1> to vector<5x8x128xi1>
    %277 = vector.broadcast %cst_53 : f32 to vector<5x8x128xf32>
    %278 = arith.select %276, %274, %277 : vector<5x8x128xi1>, vector<5x8x128xf32>
    %279 = vector.extract_strided_slice %167 {offsets = [2, 0, 0], sizes = [1, 1, 128], strides = [1, 1, 1]} : vector<3x3x128xf32> to vector<1x1x128xf32>
    %280 = vector.shape_cast %279 : vector<1x1x128xf32> to vector<128xf32>
    %281 = vector.shape_cast %280 : vector<128xf32> to vector<1x1x128xf32>
    %282 = vector.broadcast %281 : vector<1x1x128xf32> to vector<5x8x128xf32>
    %283 = arith.mulf %278, %282 : vector<5x8x128xf32>
    %284 = arith.addf %268, %283 : vector<5x8x128xf32>
    %285 = vector.extract_strided_slice %167 {offsets = [2, 1, 0], sizes = [1, 1, 128], strides = [1, 1, 1]} : vector<3x3x128xf32> to vector<1x1x128xf32>
    %286 = vector.shape_cast %285 : vector<1x1x128xf32> to vector<128xf32>
    %287 = vector.shape_cast %286 : vector<128xf32> to vector<1x1x128xf32>
    %288 = vector.broadcast %287 : vector<1x1x128xf32> to vector<5x8x128xf32>
    %289 = arith.mulf %273, %288 : vector<5x8x128xf32>
    %290 = arith.addf %284, %289 : vector<5x8x128xf32>
    %c112_i32_54 = arith.constant 112 : i32
    %291 = tpu.dynamic_rotate %273 by %c112_i32_54 dim 2 : vector<5x8x128xf32>, i32 -> vector<5x8x128xf32>
    %cst_55 = arith.constant 0.000000e+00 : f32
    %292 = vector.shape_cast %25 : vector<8x128xi1> to vector<1x8x128xi1>
    %293 = vector.broadcast %292 : vector<1x8x128xi1> to vector<5x8x128xi1>
    %294 = vector.broadcast %cst_55 : f32 to vector<5x8x128xf32>
    %295 = arith.select %293, %291, %294 : vector<5x8x128xi1>, vector<5x8x128xf32>
    %296 = vector.extract_strided_slice %167 {offsets = [2, 2, 0], sizes = [1, 1, 128], strides = [1, 1, 1]} : vector<3x3x128xf32> to vector<1x1x128xf32>
    %297 = vector.shape_cast %296 : vector<1x1x128xf32> to vector<128xf32>
    %298 = vector.shape_cast %297 : vector<128xf32> to vector<1x1x128xf32>
    %299 = vector.broadcast %298 : vector<1x1x128xf32> to vector<5x8x128xf32>
    %300 = arith.mulf %295, %299 : vector<5x8x128xf32>
    %301 = arith.addf %290, %300 : vector<5x8x128xf32>
    %302 = vector.shape_cast %301 : vector<5x8x128xf32> to vector<40x128xf32>
    %cst_56 = arith.constant dense<0.000000e+00> : vector<40x128xf32>
    %303 = tpu.matmul %302, %169, %cst_56 {dimension_numbers = #tpu.dot_dimension_numbers<[1], [0], [0], [1], [0, 0, 1, 1], [], []>} : vector<40x128xf32>, vector<128x128xf32>, vector<40x128xf32> -> vector<40x128xf32>
    %304 = vector.broadcast %170 : vector<1x128xf32> to vector<40x128xf32>
    %305 = arith.addf %303, %304 : vector<40x128xf32>
    %306 = vector.shape_cast %305 : vector<40x128xf32> to vector<1x5x8x128xf32>
    %c0_57 = arith.constant 0 : index
    %c0_58 = arith.constant 0 : index
    %c0_59 = arith.constant 0 : index
    %c0_60 = arith.constant 0 : index
    %307 = vector.load %arg11[%c0_57, %c0_58, %c0_59, %c0_60] : memref<1x5x8x128xf32, #tpu.memory_space<vmem>>, vector<1x5x8x128xf32>
    tpu.vector_store %arg11[%c0_57, %c0_58, %c0_59, %c0_60], %306 {strides = array<i32>} : memref<1x5x8x128xf32, #tpu.memory_space<vmem>>, vector<1x5x8x128xf32>,
    return
  }
  func.func @transform_0(%arg0: i32) -> (i32, i32, i32, i32) {
    %c0_i32 = arith.constant 0 : i32
    %c0_i32_0 = arith.constant 0 : i32
    %c0_i32_1 = arith.constant 0 : i32
    %c0_i32_2 = arith.constant 0 : i32
    return %arg0, %c0_i32, %c0_i32_0, %c0_i32_1 : i32, i32, i32, i32
  }
  func.func @transform_1(%arg0: i32) -> (i32, i32, i32) {
    %c0_i32 = arith.constant 0 : i32
    %c0_i32_0 = arith.constant 0 : i32
    %c0_i32_1 = arith.constant 0 : i32
    %c0_i32_2 = arith.constant 0 : i32
    return %c0_i32, %c0_i32_0, %c0_i32_1 : i32, i32, i32
  }
  func.func @transform_2(%arg0: i32) -> (i32, i32, i32) {
    %c0_i32 = arith.constant 0 : i32
    %c0_i32_0 = arith.constant 0 : i32
    %c0_i32_1 = arith.constant 0 : i32
    %c0_i32_2 = arith.constant 0 : i32
    return %c0_i32, %c0_i32_0, %c0_i32_1 : i32, i32, i32
  }
  func.func @transform_3(%arg0: i32) -> (i32, i32) {
    %c0_i32 = arith.constant 0 : i32
    %c0_i32_0 = arith.constant 0 : i32
    %c0_i32_1 = arith.constant 0 : i32
    return %c0_i32, %c0_i32_0 : i32, i32
  }
  func.func @transform_4(%arg0: i32) -> (i32, i32) {
    %c0_i32 = arith.constant 0 : i32
    %c0_i32_0 = arith.constant 0 : i32
    %c0_i32_1 = arith.constant 0 : i32
    return %c0_i32, %c0_i32_0 : i32, i32
  }
  func.func @transform_5(%arg0: i32) -> (i32, i32) {
    %c0_i32 = arith.constant 0 : i32
    %c0_i32_0 = arith.constant 0 : i32
    %c0_i32_1 = arith.constant 0 : i32
    return %c0_i32, %c0_i32_0 : i32, i32
  }
  func.func @transform_6(%arg0: i32) -> (i32, i32, i32) {
    %c0_i32 = arith.constant 0 : i32
    %c0_i32_0 = arith.constant 0 : i32
    %c0_i32_1 = arith.constant 0 : i32
    %c0_i32_2 = arith.constant 0 : i32
    return %c0_i32, %c0_i32_0, %c0_i32_1 : i32, i32, i32
  }
  func.func @transform_7(%arg0: i32) -> (i32, i32) {
    %c0_i32 = arith.constant 0 : i32
    %c0_i32_0 = arith.constant 0 : i32
    %c0_i32_1 = arith.constant 0 : i32
    return %c0_i32, %c0_i32_0 : i32, i32
  }
  func.func @transform_8(%arg0: i32) -> (i32, i32) {
    %c0_i32 = arith.constant 0 : i32
    %c0_i32_0 = arith.constant 0 : i32
    %c0_i32_1 = arith.constant 0 : i32
    return %c0_i32, %c0_i32_0 : i32, i32
  }
  func.func @transform_9(%arg0: i32) -> (i32, i32) {
    %c0_i32 = arith.constant 0 : i32
    %c0_i32_0 = arith.constant 0 : i32
    %c0_i32_1 = arith.constant 0 : i32
    return %c0_i32, %c0_i32_0 : i32, i32
  }
  func.func @transform_10(%arg0: i32) -> (i32, i32, i32, i32) {
    %c0_i32 = arith.constant 0 : i32
    %c0_i32_0 = arith.constant 0 : i32
    %c0_i32_1 = arith.constant 0 : i32
    %c0_i32_2 = arith.constant 0 : i32
    return %arg0, %c0_i32, %c0_i32_0, %c0_i32_1 : i32, i32, i32, i32
  }
}

</mosaic_0001>

<llo_original>
// kernel: tile.42
$region0: #{tile.42}
  %s0 = inlined_call_operand.vmem [shape: f32[3,3,8,16], index: 0, kind: input, shape index: {}]
  %s1 = inlined_call_operand.vmem [shape: f32[3,3,128], index: 1, kind: output, shape index: {}]
  $region1: #{tile.42} parent=0
    #allocation0 [shape = 'u8[12288]{0}', space=vmem, size = 0x3000, scoped, tag = 'scoped mem for output reshape']
    %v2 = vld [vmem:[%s0] ss:$8 sm:$0xf]
    %v3 = vld [vmem:[%s0] ss:$8 sm:$0xf0]
    %vm4 = vcmask 1047556
    %v5 = vsel %vm4, %v3, %v2
    %vm6 = vcmask 130048
    %7 = vst.msk [vmem:[#allocation0] sm:$0x7] %vm6, %v5
    %s8 = scalar_lea.vmem [#allocation0], 5
    %9 = vst.msk [vmem:[%s8] sm:$0x38] %vm6, %v5
    %s10 = scalar_lea.vmem [#allocation0], 10
    %11 = vst.msk [vmem:[%s10] sm:$0xc0] %vm6, %v5
    %s12 = scalar_lea.vmem %s0, 64
    %v13 = vld [vmem:[%s12] sm:$0x1]
    %vm14 = vcmask 130048
    %s15 = scalar_lea.vmem [#allocation0], 18
    %16 = vst.msk [vmem:[%s15] sm:$0x1] %vm14, %v13
    %s17 = scalar_lea.vmem %s0, 7
    %v18 = vld [vmem:[%s17] ss:$8 sm:$0xf]
    %s19 = scalar_lea.vmem %s0, 7
    %v20 = vld [vmem:[%s19] ss:$8 sm:$0xf0]
    %vm21 = vcmask 1047556
    %v22 = vsel %vm21, %v20, %v18
    %23 = vrot.lane.b32.xlu0 %v22, 112
    %v24 = vpop.permute.xlu0 %23
    %vm25 = vcmask 1048448
    %26 = vst.msk [vmem:[#allocation0] sm:$0x7] %vm25, %v24
    %s27 = scalar_lea.vmem [#allocation0], 5
    %28 = vst.msk [vmem:[%s27] sm:$0x38] %vm25, %v24
    %s29 = scalar_lea.vmem [#allocation0], 10
    %30 = vst.msk [vmem:[%s29] sm:$0xc0] %vm25, %v24
    %s31 = scalar_lea.vmem %s0, 71
    %v32 = vld [vmem:[%s31] sm:$0x1]
    %33 = vrot.lane.b32.xlu0 %v32, 112
    %v34 = vpop.permute.xlu0 %33
    %vm35 = vcmask 1048448
    %s36 = scalar_lea.vmem [#allocation0], 18
    %37 = vst.msk [vmem:[%s36] sm:$0x1] %vm35, %v34
    %s38 = scalar_lea.vmem %s0, 6
    %v39 = vld [vmem:[%s38] ss:$8 sm:$0xf]
    %s40 = scalar_lea.vmem %s0, 6
    %v41 = vld [vmem:[%s40] ss:$8 sm:$0xf0]
    %vm42 = vcmask 1047556
    %v43 = vsel %vm42, %v41, %v39
    %44 = vrot.lane.b32.xlu0 %v43, 96
    %v45 = vpop.permute.xlu0 %44
    %vm46 = vcmask 917248
    %47 = vst.msk [vmem:[#allocation0] sm:$0x7] %vm46, %v45
    %s48 = scalar_lea.vmem [#allocation0], 5
    %49 = vst.msk [vmem:[%s48] sm:$0x38] %vm46, %v45
    %s50 = scalar_lea.vmem [#allocation0], 10
    %51 = vst.msk [vmem:[%s50] sm:$0xc0] %vm46, %v45
    %s52 = scalar_lea.vmem %s0, 70
    %v53 = vld [vmem:[%s52] sm:$0x1]
    %54 = vrot.lane.b32.xlu0 %v53, 96
    %v55 = vpop.permute.xlu0 %54
    %vm56 = vcmask 917248
    %s57 = scalar_lea.vmem [#allocation0], 18
    %58 = vst.msk [vmem:[%s57] sm:$0x1] %vm56, %v55
    %s59 = scalar_lea.vmem %s0, 5
    %v60 = vld [vmem:[%s59] ss:$8 sm:$0xf]
    %s61 = scalar_lea.vmem %s0, 5
    %v62 = vld [vmem:[%s61] ss:$8 sm:$0xf0]
    %vm63 = vcmask 1047556
    %v64 = vsel %vm63, %v62, %v60
    %65 = vrot.lane.b32.xlu0 %v64, 80
    %v66 = vpop.permute.xlu0 %65
    %vm67 = vcmask 786048
    %68 = vst.msk [vmem:[#allocation0] sm:$0x7] %vm67, %v66
    %s69 = scalar_lea.vmem [#allocation0], 5
    %70 = vst.msk [vmem:[%s69] sm:$0x38] %vm67, %v66
    %s71 = scalar_lea.vmem [#allocation0], 10
    %72 = vst.msk [vmem:[%s71] sm:$0xc0] %vm67, %v66
    %s73 = scalar_lea.vmem %s0, 69
    %v74 = vld [vmem:[%s73] sm:$0x1]
    %75 = vrot.lane.b32.xlu0 %v74, 80
    %v76 = vpop.permute.xlu0 %75
    %vm77 = vcmask 786048
    %s78 = scalar_lea.vmem [#allocation0], 18
    %79 = vst.msk [vmem:[%s78] sm:$0x1] %vm77, %v76
    %s80 = scalar_lea.vmem %s0, 4
    %v81 = vld [vmem:[%s80] ss:$8 sm:$0xf]
    %s82 = scalar_lea.vmem %s0, 4
    %v83 = vld [vmem:[%s82] ss:$8 sm:$0xf0]
    %vm84 = vcmask 1047556
    %v85 = vsel %vm84, %v83, %v81
    %86 = vrot.lane.b32.xlu0 %v85, 64
    %v87 = vpop.permute.xlu0 %86
    %vm88 = vcmask 654848
    %89 = vst.msk [vmem:[#allocation0] sm:$0x7] %vm88, %v87
    %s90 = scalar_lea.vmem [#allocation0], 5
    %91 = vst.msk [vmem:[%s90] sm:$0x38] %vm88, %v87
    %s92 = scalar_lea.vmem [#allocation0], 10
    %93 = vst.msk [vmem:[%s92] sm:$0xc0] %vm88, %v87
    %s94 = scalar_lea.vmem %s0, 68
    %v95 = vld [vmem:[%s94] sm:$0x1]
    %96 = vrot.lane.b32.xlu0 %v95, 64
    %v97 = vpop.permute.xlu0 %96
    %vm98 = vcmask 654848
    %s99 = scalar_lea.vmem [#allocation0], 18
    %100 = vst.msk [vmem:[%s99] sm:$0x1] %vm98, %v97
    %s101 = scalar_lea.vmem %s0, 3
    %v102 = vld [vmem:[%s101] ss:$8 sm:$0xf]
    %s103 = scalar_lea.vmem %s0, 3
    %v104 = vld [vmem:[%s103] ss:$8 sm:$0xf0]
    %vm105 = vcmask 1047556
    %v106 = vsel %vm105, %v104, %v102
    %107 = vrot.lane.b32.xlu0 %v106, 48
    %v108 = vpop.permute.xlu0 %107
    %vm109 = vcmask 523648
    %110 = vst.msk [vmem:[#allocation0] sm:$0x7] %vm109, %v108
    %s111 = scalar_lea.vmem [#allocation0], 5
    %112 = vst.msk [vmem:[%s111] sm:$0x38] %vm109, %v108
    %s113 = scalar_lea.vmem [#allocation0], 10
    %114 = vst.msk [vmem:[%s113] sm:$0xc0] %vm109, %v108
    %s115 = scalar_lea.vmem %s0, 67
    %v116 = vld [vmem:[%s115] sm:$0x1]
    %117 = vrot.lane.b32.xlu0 %v116, 48
    %v118 = vpop.permute.xlu0 %117
    %vm119 = vcmask 523648
    %s120 = scalar_lea.vmem [#allocation0], 18
    %121 = vst.msk [vmem:[%s120] sm:$0x1] %vm119, %v118
    %s122 = scalar_lea.vmem %s0, 2
    %v123 = vld [vmem:[%s122] ss:$8 sm:$0xf]
    %s124 = scalar_lea.vmem %s0, 2
    %v125 = vld [vmem:[%s124] ss:$8 sm:$0xf0]
    %vm126 = vcmask 1047556
    %v127 = vsel %vm126, %v125, %v123
    %128 = vrot.lane.b32.xlu0 %v127, 32
    %v129 = vpop.permute.xlu0 %128
    %vm130 = vcmask 392448
    %131 = vst.msk [vmem:[#allocation0] sm:$0x7] %vm130, %v129
    %s132 = scalar_lea.vmem [#allocation0], 5
    %133 = vst.msk [vmem:[%s132] sm:$0x38] %vm130, %v129
    %s134 = scalar_lea.vmem [#allocation0], 10
    %135 = vst.msk [vmem:[%s134] sm:$0xc0] %vm130, %v129
    %s136 = scalar_lea.vmem %s0, 66
    %v137 = vld [vmem:[%s136] sm:$0x1]
    %138 = vrot.lane.b32.xlu0 %v137, 32
    %v139 = vpop.permute.xlu0 %138
    %vm140 = vcmask 392448
    %s141 = scalar_lea.vmem [#allocation0], 18
    %142 = vst.msk [vmem:[%s141] sm:$0x1] %vm140, %v139
    %s143 = scalar_lea.vmem %s0, 1
    %v144 = vld [vmem:[%s143] ss:$8 sm:$0xf]
    %s145 = scalar_lea.vmem %s0, 1
    %v146 = vld [vmem:[%s145] ss:$8 sm:$0xf0]
    %vm147 = vcmask 1047556
    %v148 = vsel %vm147, %v146, %v144
    %149 = vrot.lane.b32.xlu0 %v148, 16
    %v150 = vpop.permute.xlu0 %149
    %vm151 = vcmask 261248
    %152 = vst.msk [vmem:[#allocation0] sm:$0x7] %vm151, %v150
    %s153 = scalar_lea.vmem [#allocation0], 5
    %154 = vst.msk [vmem:[%s153] sm:$0x38] %vm151, %v150
    %s155 = scalar_lea.vmem [#allocation0], 10
    %156 = vst.msk [vmem:[%s155] sm:$0xc0] %vm151, %v150
    %s157 = scalar_lea.vmem %s0, 65
    %v158 = vld [vmem:[%s157] sm:$0x1]
    %159 = vrot.lane.b32.xlu0 %v158, 16
    %v160 = vpop.permute.xlu0 %159
    %vm161 = vcmask 261248
    %s162 = scalar_lea.vmem [#allocation0], 18
    %163 = vst.msk [vmem:[%s162] sm:$0x1] %vm161, %v160
    %s165 = ssub.s32 16, 1
    %v166 = vld [vmem:[#allocation0] sm:%s165]
    %s168 = ssub.s32 16, 1
    %169 = vst [vmem:[%s1] sm:%s168] %v166
    %s170 = scalar_lea.vmem [#allocation0], 8
    %v171 = vld [vmem:[%s170] sm:%s165]
    %s173 = ssub.s32 16, 1
    %s174 = scalar_lea.vmem %s1, 4
    %175 = vst [vmem:[%s174] sm:%s173] %v171
    %s176 = scalar_lea.vmem [#allocation0], 16
    %v177 = vld [vmem:[%s176] sm:%s165]
    %s179 = ssub.s32 16, 1
    %s180 = scalar_lea.vmem %s1, 8
    %181 = vst [vmem:[%s180] sm:%s179] %v177

// kernel: tile.37
$region0: #{tile.37}
  %s0 = inlined_call_operand.vmem [shape: f32[5,5,8,16], index: 0, kind: input, shape index: {}]
  %s1 = inlined_call_operand.vmem [shape: f32[5,5,128], index: 1, kind: output, shape index: {}]
  %v2 = vld [vmem:[%s0] ss:$8 sm:$0xf]
  %v3 = vld [vmem:[%s0] ss:$8 sm:$0xf0]
  %vm4 = vcmask 1047556
  %v5 = vsel %vm4, %v3, %v2
  %vm6 = vcmask 130048
  %7 = vst.msk [vmem:[%s1] sm:$0x1f] %vm6, %v5
  %s8 = scalar_lea.vmem %s1, 3
  %9 = vst.msk [vmem:[%s8] sm:$0xe0] %vm6, %v5
  %s10 = scalar_lea.vmem %s0, 64
  %v11 = vld [vmem:[%s10] ss:$8 sm:$0xf]
  %s12 = scalar_lea.vmem %s0, 64
  %v13 = vld [vmem:[%s12] ss:$8 sm:$0xf0]
  %vm14 = vcmask 1047556
  %v15 = vsel %vm14, %v13, %v11
  %vm16 = vcmask 130048
  %s17 = scalar_lea.vmem %s1, 11
  %18 = vst.msk [vmem:[%s17] sm:$0x3] %vm16, %v15
  %s19 = scalar_lea.vmem %s1, 14
  %20 = vst.msk [vmem:[%s19] sm:$0x7c] %vm16, %v15
  %s21 = scalar_lea.vmem %s1, 17
  %22 = vst.msk [vmem:[%s21] sm:$0x80] %vm16, %v15
  %s23 = scalar_lea.vmem %s0, 128
  %v24 = vld [vmem:[%s23] ss:$8 sm:$0xf]
  %s25 = scalar_lea.vmem %s0, 128
  %v26 = vld [vmem:[%s25] ss:$8 sm:$0xf0]
  %vm27 = vcmask 1047556
  %v28 = vsel %vm27, %v26, %v24
  %vm29 = vcmask 130048
  %s30 = scalar_lea.vmem %s1, 25
  %31 = vst.msk [vmem:[%s30] sm:$0xf] %vm29, %v28
  %s32 = scalar_lea.vmem %s1, 28
  %33 = vst.msk [vmem:[%s32] sm:$0xf0] %vm29, %v28
  %s34 = scalar_lea.vmem %s0, 192
  %v35 = vld [vmem:[%s34] sm:$0x1]
  %vm36 = vcmask 130048
  %s37 = scalar_lea.vmem %s1, 36
  %38 = vst.msk [vmem:[%s37] sm:$0x1] %vm36, %v35
  %s39 = scalar_lea.vmem %s0, 7
  %v40 = vld [vmem:[%s39] ss:$8 sm:$0xf]
  %s41 = scalar_lea.vmem %s0, 7
  %v42 = vld [vmem:[%s41] ss:$8 sm:$0xf0]
  %vm43 = vcmask 1047556
  %v44 = vsel %vm43, %v42, %v40
  %45 = vrot.lane.b32.xlu0 %v44, 112
  %v46 = vpop.permute.xlu0 %45
  %vm47 = vcmask 1048448
  %48 = vst.msk [vmem:[%s1] sm:$0x1f] %vm47, %v46
  %s49 = scalar_lea.vmem %s1, 3
  %50 = vst.msk [vmem:[%s49] sm:$0xe0] %vm47, %v46
  %s51 = scalar_lea.vmem %s0, 167
  %v52 = vld [vmem:[%s51] ss:$8 sm:$0xf]
  %s53 = scalar_lea.vmem %s0, 195
  %v54 = vld [vmem:[%s53] sm:$0x10]
  %vm55 = vcmask 1044484
  %v56 = vsel %vm55, %v54, %v52
  %s57 = scalar_lea.vmem %s0, 31
  %v58 = vld [vmem:[%s57] ss:$8 sm:$0xe0]
  %vm59 = vcmask 1047557
  %v60 = vsel %vm59, %v58, %v56
  %61 = vrot.lane.b32.xlu0 %v60, 112
  %v62 = vpop.permute.xlu0 %61
  %vm63 = vcmask 1048448
  %s64 = scalar_lea.vmem %s1, 32
  %65 = vst.msk [vmem:[%s64] sm:$0x1f] %vm63, %v62
  %s66 = scalar_lea.vmem %s1, 6
  %67 = vst.msk [vmem:[%s66] sm:$0x60] %vm63, %v62
  %s68 = scalar_lea.vmem %s1, 9
  %69 = vst.msk [vmem:[%s68] sm:$0x80] %vm63, %v62
  %s70 = scalar_lea.vmem %s0, 95
  %v71 = vld [vmem:[%s70] ss:$8 sm:$0xf]
  %s72 = scalar_lea.vmem %s0, 95
  %v73 = vld [vmem:[%s72] ss:$8 sm:$0xf0]
  %vm74 = vcmask 1047556
  %v75 = vsel %vm74, %v73, %v71
  %76 = vrot.lane.b32.xlu0 %v75, 112
  %v77 = vpop.permute.xlu0 %76
  %vm78 = vcmask 1048448
  %s79 = scalar_lea.vmem %s1, 17
  %80 = vst.msk [vmem:[%s79] sm:$0xf] %vm78, %v77
  %s81 = scalar_lea.vmem %s1, 20
  %82 = vst.msk [vmem:[%s81] sm:$0xf0] %vm78, %v77
  %s83 = scalar_lea.vmem %s0, 159
  %v84 = vld [vmem:[%s83] sm:$0x1]
  %85 = vrot.lane.b32.xlu0 %v84, 112
  %v86 = vpop.permute.xlu0 %85
  %vm87 = vcmask 1048448
  %s88 = scalar_lea.vmem %s1, 28
  %89 = vst.msk [vmem:[%s88] sm:$0x1] %vm87, %v86
  %s90 = scalar_lea.vmem %s0, 6
  %v91 = vld [vmem:[%s90] ss:$8 sm:$0xf]
  %s92 = scalar_lea.vmem %s0, 6
  %v93 = vld [vmem:[%s92] ss:$8 sm:$0xf0]
  %vm94 = vcmask 1047556
  %v95 = vsel %vm94, %v93, %v91
  %96 = vrot.lane.b32.xlu0 %v95, 96
  %v97 = vpop.permute.xlu0 %96
  %vm98 = vcmask 917248
  %99 = vst.msk [vmem:[%s1] sm:$0x1f] %vm98, %v97
  %s100 = scalar_lea.vmem %s1, 3
  %101 = vst.msk [vmem:[%s100] sm:$0xe0] %vm98, %v97
  %s102 = scalar_lea.vmem %s0, 166
  %v103 = vld [vmem:[%s102] ss:$8 sm:$0xf]
  %s104 = scalar_lea.vmem %s0, 194
  %v105 = vld [vmem:[%s104] sm:$0x10]
  %vm106 = vcmask 1044484
  %v107 = vsel %vm106, %v105, %v103
  %s108 = scalar_lea.vmem %s0, 30
  %v109 = vld [vmem:[%s108] ss:$8 sm:$0xe0]
  %vm110 = vcmask 1047557
  %v111 = vsel %vm110, %v109, %v107
  %112 = vrot.lane.b32.xlu0 %v111, 96
  %v113 = vpop.permute.xlu0 %112
  %vm114 = vcmask 917248
  %s115 = scalar_lea.vmem %s1, 32
  %116 = vst.msk [vmem:[%s115] sm:$0x1f] %vm114, %v113
  %s117 = scalar_lea.vmem %s1, 6
  %118 = vst.msk [vmem:[%s117] sm:$0x60] %vm114, %v113
  %s119 = scalar_lea.vmem %s1, 9
  %120 = vst.msk [vmem:[%s119] sm:$0x80] %vm114, %v113
  %s121 = scalar_lea.vmem %s0, 94
  %v122 = vld [vmem:[%s121] ss:$8 sm:$0xf]
  %s123 = scalar_lea.vmem %s0, 94
  %v124 = vld [vmem:[%s123] ss:$8 sm:$0xf0]
  %vm125 = vcmask 1047556
  %v126 = vsel %vm125, %v124, %v122
  %127 = vrot.lane.b32.xlu0 %v126, 96
  %v128 = vpop.permute.xlu0 %127
  %vm129 = vcmask 917248
  %s130 = scalar_lea.vmem %s1, 17
  %131 = vst.msk [vmem:[%s130] sm:$0xf] %vm129, %v128
  %s132 = scalar_lea.vmem %s1, 20
  %133 = vst.msk [vmem:[%s132] sm:$0xf0] %vm129, %v128
  %s134 = scalar_lea.vmem %s0, 158
  %v135 = vld [vmem:[%s134] sm:$0x1]
  %136 = vrot.lane.b32.xlu0 %v135, 96
  %v137 = vpop.permute.xlu0 %136
  %vm138 = vcmask 917248
  %s139 = scalar_lea.vmem %s1, 28
  %140 = vst.msk [vmem:[%s139] sm:$0x1] %vm138, %v137
  %s141 = scalar_lea.vmem %s0, 5
  %v142 = vld [vmem:[%s141] ss:$8 sm:$0xf]
  %s143 = scalar_lea.vmem %s0, 5
  %v144 = vld [vmem:[%s143] ss:$8 sm:$0xf0]
  %vm145 = vcmask 1047556
  %v146 = vsel %vm145, %v144, %v142
  %147 = vrot.lane.b32.xlu0 %v146, 80
  %v148 = vpop.permute.xlu0 %147
  %vm149 = vcmask 786048
  %150 = vst.msk [vmem:[%s1] sm:$0x1f] %vm149, %v148
  %s151 = scalar_lea.vmem %s1, 3
  %152 = vst.msk [vmem:[%s151] sm:$0xe0] %vm149, %v148
  %s153 = scalar_lea.vmem %s0, 165
  %v154 = vld [vmem:[%s153] ss:$8 sm:$0xf]
  %s155 = scalar_lea.vmem %s0, 193
  %v156 = vld [vmem:[%s155] sm:$0x10]
  %vm157 = vcmask 1044484
  %v158 = vsel %vm157, %v156, %v154
  %s159 = scalar_lea.vmem %s0, 29
  %v160 = vld [vmem:[%s159] ss:$8 sm:$0xe0]
  %vm161 = vcmask 1047557
  %v162 = vsel %vm161, %v160, %v158
  %163 = vrot.lane.b32.xlu0 %v162, 80
  %v164 = vpop.permute.xlu0 %163
  %vm165 = vcmask 786048
  %s166 = scalar_lea.vmem %s1, 32
  %167 = vst.msk [vmem:[%s166] sm:$0x1f] %vm165, %v164
  %s168 = scalar_lea.vmem %s1, 6
  %169 = vst.msk [vmem:[%s168] sm:$0x60] %vm165, %v164
  %s170 = scalar_lea.vmem %s1, 9
  %171 = vst.msk [vmem:[%s170] sm:$0x80] %vm165, %v164
  %s172 = scalar_lea.vmem %s0, 93
  %v173 = vld [vmem:[%s172] ss:$8 sm:$0xf]
  %s174 = scalar_lea.vmem %s0, 93
  %v175 = vld [vmem:[%s174] ss:$8 sm:$0xf0]
  %vm176 = vcmask 1047556
  %v177 = vsel %vm176, %v175, %v173
  %178 = vrot.lane.b32.xlu0 %v177, 80
  %v179 = vpop.permute.xlu0 %178
  %vm180 = vcmask 786048
  %s181 = scalar_lea.vmem %s1, 17
  %182 = vst.msk [vmem:[%s181] sm:$0xf] %vm180, %v179
  %s183 = scalar_lea.vmem %s1, 20
  %184 = vst.msk [vmem:[%s183] sm:$0xf0] %vm180, %v179
  %s185 = scalar_lea.vmem %s0, 157
  %v186 = vld [vmem:[%s185] sm:$0x1]
  %187 = vrot.lane.b32.xlu0 %v186, 80
  %v188 = vpop.permute.xlu0 %187
  %vm189 = vcmask 786048
  %s190 = scalar_lea.vmem %s1, 28
  %191 = vst.msk [vmem:[%s190] sm:$0x1] %vm189, %v188
  %s192 = scalar_lea.vmem %s0, 4
  %v193 = vld [vmem:[%s192] ss:$8 sm:$0xf]
  %s194 = scalar_lea.vmem %s0, 4
  %v195 = vld [vmem:[%s194] ss:$8 sm:$0xf0]
  %vm196 = vcmask 1047556
  %v197 = vsel %vm196, %v195, %v193
  %198 = vrot.lane.b32.xlu0 %v197, 64
  %v199 = vpop.permute.xlu0 %198
  %vm200 = vcmask 654848
  %201 = vst.msk [vmem:[%s1] sm:$0x1f] %vm200, %v199
  %s202 = scalar_lea.vmem %s1, 3
  %203 = vst.msk [vmem:[%s202] sm:$0xe0] %vm200, %v199
  %s204 = scalar_lea.vmem %s0, 164
  %v205 = vld [vmem:[%s204] ss:$8 sm:$0xf]
  %s206 = scalar_lea.vmem %s0, 192
  %v207 = vld [vmem:[%s206] sm:$0x10]
  %vm208 = vcmask 1044484
  %v209 = vsel %vm208, %v207, %v205
  %s210 = scalar_lea.vmem %s0, 28
  %v211 = vld [vmem:[%s210] ss:$8 sm:$0xe0]
  %vm212 = vcmask 1047557
  %v213 = vsel %vm212, %v211, %v209
  %214 = vrot.lane.b32.xlu0 %v213, 64
  %v215 = vpop.permute.xlu0 %214
  %vm216 = vcmask 654848
  %s217 = scalar_lea.vmem %s1, 32
  %218 = vst.msk [vmem:[%s217] sm:$0x1f] %vm216, %v215
  %s219 = scalar_lea.vmem %s1, 6
  %220 = vst.msk [vmem:[%s219] sm:$0x60] %vm216, %v215
  %s221 = scalar_lea.vmem %s1, 9
  %222 = vst.msk [vmem:[%s221] sm:$0x80] %vm216, %v215
  %s223 = scalar_lea.vmem %s0, 92
  %v224 = vld [vmem:[%s223] ss:$8 sm:$0xf]
  %s225 = scalar_lea.vmem %s0, 92
  %v226 = vld [vmem:[%s225] ss:$8 sm:$0xf0]
  %vm227 = vcmask 1047556
  %v228 = vsel %vm227, %v226, %v224
  %229 = vrot.lane.b32.xlu0 %v228, 64
  %v230 = vpop.permute.xlu0 %229
  %vm231 = vcmask 654848
  %s232 = scalar_lea.vmem %s1, 17
  %233 = vst.msk [vmem:[%s232] sm:$0xf] %vm231, %v230
  %s234 = scalar_lea.vmem %s1, 20
  %235 = vst.msk [vmem:[%s234] sm:$0xf0] %vm231, %v230
  %s236 = scalar_lea.vmem %s0, 156
  %v237 = vld [vmem:[%s236] sm:$0x1]
  %238 = vrot.lane.b32.xlu0 %v237, 64
  %v239 = vpop.permute.xlu0 %238
  %vm240 = vcmask 654848
  %s241 = scalar_lea.vmem %s1, 28
  %242 = vst.msk [vmem:[%s241] sm:$0x1] %vm240, %v239
  %s243 = scalar_lea.vmem %s0, 3
  %v244 = vld [vmem:[%s243] ss:$8 sm:$0xf]
  %s245 = scalar_lea.vmem %s0, 3
  %v246 = vld [vmem:[%s245] ss:$8 sm:$0xf0]
  %vm247 = vcmask 1047556
  %v248 = vsel %vm247, %v246, %v244
  %249 = vrot.lane.b32.xlu0 %v248, 48
  %v250 = vpop.permute.xlu0 %249
  %vm251 = vcmask 523648
  %252 = vst.msk [vmem:[%s1] sm:$0x1f] %vm251, %v250
  %s253 = scalar_lea.vmem %s1, 3
  %254 = vst.msk [vmem:[%s253] sm:$0xe0] %vm251, %v250
  %s255 = scalar_lea.vmem %s0, 163
  %v256 = vld [vmem:[%s255] ss:$8 sm:$0xf]
  %s257 = scalar_lea.vmem %s0, 191
  %v258 = vld [vmem:[%s257] sm:$0x10]
  %vm259 = vcmask 1044484
  %v260 = vsel %vm259, %v258, %v256
  %s261 = scalar_lea.vmem %s0, 27
  %v262 = vld [vmem:[%s261] ss:$8 sm:$0xe0]
  %vm263 = vcmask 1047557
  %v264 = vsel %vm263, %v262, %v260
  %265 = vrot.lane.b32.xlu0 %v264, 48
  %v266 = vpop.permute.xlu0 %265
  %vm267 = vcmask 523648
  %s268 = scalar_lea.vmem %s1, 32
  %269 = vst.msk [vmem:[%s268] sm:$0x1f] %vm267, %v266
  %s270 = scalar_lea.vmem %s1, 6
  %271 = vst.msk [vmem:[%s270] sm:$0x60] %vm267, %v266
  %s272 = scalar_lea.vmem %s1, 9
  %273 = vst.msk [vmem:[%s272] sm:$0x80] %vm267, %v266
  %s274 = scalar_lea.vmem %s0, 91
  %v275 = vld [vmem:[%s274] ss:$8 sm:$0xf]
  %s276 = scalar_lea.vmem %s0, 91
  %v277 = vld [vmem:[%s276] ss:$8 sm:$0xf0]
  %vm278 = vcmask 1047556
  %v279 = vsel %vm278, %v277, %v275
  %280 = vrot.lane.b32.xlu0 %v279, 48
  %v281 = vpop.permute.xlu0 %280
  %vm282 = vcmask 523648
  %s283 = scalar_lea.vmem %s1, 17
  %284 = vst.msk [vmem:[%s283] sm:$0xf] %vm282, %v281
  %s285 = scalar_lea.vmem %s1, 20
  %286 = vst.msk [vmem:[%s285] sm:$0xf0] %vm282, %v281
  %s287 = scalar_lea.vmem %s0, 155
  %v288 = vld [vmem:[%s287] sm:$0x1]
  %289 = vrot.lane.b32.xlu0 %v288, 48
  %v290 = vpop.permute.xlu0 %289
  %vm291 = vcmask 523648
  %s292 = scalar_lea.vmem %s1, 28
  %293 = vst.msk [vmem:[%s292] sm:$0x1] %vm291, %v290
  %s294 = scalar_lea.vmem %s0, 2
  %v295 = vld [vmem:[%s294] ss:$8 sm:$0xf]
  %s296 = scalar_lea.vmem %s0, 2
  %v297 = vld [vmem:[%s296] ss:$8 sm:$0xf0]
  %vm298 = vcmask 1047556
  %v299 = vsel %vm298, %v297, %v295
  %300 = vrot.lane.b32.xlu0 %v299, 32
  %v301 = vpop.permute.xlu0 %300
  %vm302 = vcmask 392448
  %303 = vst.msk [vmem:[%s1] sm:$0x1f] %vm302, %v301
  %s304 = scalar_lea.vmem %s1, 3
  %305 = vst.msk [vmem:[%s304] sm:$0xe0] %vm302, %v301
  %s306 = scalar_lea.vmem %s0, 162
  %v307 = vld [vmem:[%s306] ss:$8 sm:$0xf]
  %s308 = scalar_lea.vmem %s0, 190
  %v309 = vld [vmem:[%s308] sm:$0x10]
  %vm310 = vcmask 1044484
  %v311 = vsel %vm310, %v309, %v307
  %s312 = scalar_lea.vmem %s0, 26
  %v313 = vld [vmem:[%s312] ss:$8 sm:$0xe0]
  %vm314 = vcmask 1047557
  %v315 = vsel %vm314, %v313, %v311
  %316 = vrot.lane.b32.xlu0 %v315, 32
  %v317 = vpop.permute.xlu0 %316
  %vm318 = vcmask 392448
  %s319 = scalar_lea.vmem %s1, 32
  %320 = vst.msk [vmem:[%s319] sm:$0x1f] %vm318, %v317
  %s321 = scalar_lea.vmem %s1, 6
  %322 = vst.msk [vmem:[%s321] sm:$0x60] %vm318, %v317
  %s323 = scalar_lea.vmem %s1, 9
  %324 = vst.msk [vmem:[%s323] sm:$0x80] %vm318, %v317
  %s325 = scalar_lea.vmem %s0, 90
  %v326 = vld [vmem:[%s325] ss:$8 sm:$0xf]
  %s327 = scalar_lea.vmem %s0, 90
  %v328 = vld [vmem:[%s327] ss:$8 sm:$0xf0]
  %vm329 = vcmask 1047556
  %v330 = vsel %vm329, %v328, %v326
  %331 = vrot.lane.b32.xlu0 %v330, 32
  %v332 = vpop.permute.xlu0 %331
  %vm333 = vcmask 392448
  %s334 = scalar_lea.vmem %s1, 17
  %335 = vst.msk [vmem:[%s334] sm:$0xf] %vm333, %v332
  %s336 = scalar_lea.vmem %s1, 20
  %337 = vst.msk [vmem:[%s336] sm:$0xf0] %vm333, %v332
  %s338 = scalar_lea.vmem %s0, 154
  %v339 = vld [vmem:[%s338] sm:$0x1]
  %340 = vrot.lane.b32.xlu0 %v339, 32
  %v341 = vpop.permute.xlu0 %340
  %vm342 = vcmask 392448
  %s343 = scalar_lea.vmem %s1, 28
  %344 = vst.msk [vmem:[%s343] sm:$0x1] %vm342, %v341
  %s345 = scalar_lea.vmem %s0, 1
  %v346 = vld [vmem:[%s345] ss:$8 sm:$0xf]
  %s347 = scalar_lea.vmem %s0, 1
  %v348 = vld [vmem:[%s347] ss:$8 sm:$0xf0]
  %vm349 = vcmask 1047556
  %v350 = vsel %vm349, %v348, %v346
  %351 = vrot.lane.b32.xlu0 %v350, 16
  %v352 = vpop.permute.xlu0 %351
  %vm353 = vcmask 261248
  %354 = vst.msk [vmem:[%s1] sm:$0x1f] %vm353, %v352
  %s355 = scalar_lea.vmem %s1, 3
  %356 = vst.msk [vmem:[%s355] sm:$0xe0] %vm353, %v352
  %s357 = scalar_lea.vmem %s0, 161
  %v358 = vld [vmem:[%s357] ss:$8 sm:$0xf]
  %s359 = scalar_lea.vmem %s0, 189
  %v360 = vld [vmem:[%s359] sm:$0x10]
  %vm361 = vcmask 1044484
  %v362 = vsel %vm361, %v360, %v358
  %s363 = scalar_lea.vmem %s0, 25
  %v364 = vld [vmem:[%s363] ss:$8 sm:$0xe0]
  %vm365 = vcmask 1047557
  %v366 = vsel %vm365, %v364, %v362
  %367 = vrot.lane.b32.xlu0 %v366, 16
  %v368 = vpop.permute.xlu0 %367
  %vm369 = vcmask 261248
  %s370 = scalar_lea.vmem %s1, 32
  %371 = vst.msk [vmem:[%s370] sm:$0x1f] %vm369, %v368
  %s372 = scalar_lea.vmem %s1, 6
  %373 = vst.msk [vmem:[%s372] sm:$0x60] %vm369, %v368
  %s374 = scalar_lea.vmem %s1, 9
  %375 = vst.msk [vmem:[%s374] sm:$0x80] %vm369, %v368
  %s376 = scalar_lea.vmem %s0, 89
  %v377 = vld [vmem:[%s376] ss:$8 sm:$0xf]
  %s378 = scalar_lea.vmem %s0, 89
  %v379 = vld [vmem:[%s378] ss:$8 sm:$0xf0]
  %vm380 = vcmask 1047556
  %v381 = vsel %vm380, %v379, %v377
  %382 = vrot.lane.b32.xlu0 %v381, 16
  %v383 = vpop.permute.xlu0 %382
  %vm384 = vcmask 261248
  %s385 = scalar_lea.vmem %s1, 17
  %386 = vst.msk [vmem:[%s385] sm:$0xf] %vm384, %v383
  %s387 = scalar_lea.vmem %s1, 20
  %388 = vst.msk [vmem:[%s387] sm:$0xf0] %vm384, %v383
  %s389 = scalar_lea.vmem %s0, 153
  %v390 = vld [vmem:[%s389] sm:$0x1]
  %391 = vrot.lane.b32.xlu0 %v390, 16
  %v392 = vpop.permute.xlu0 %391
  %vm393 = vcmask 261248
  %s394 = scalar_lea.vmem %s1, 28
  %395 = vst.msk [vmem:[%s394] sm:$0x1] %vm393, %v392

// kernel: _lambda_.1
$region0: #{_lambda_.1}
  #allocation0 [shape = 'u32[]', space=smem, size = 0x4, offset = 0x4, fixed_abs, tag = 'smem constant byte address 0x4 - core index']
  #allocation1 [shape = 'u32[72,128]{1,0:T(1,128)}', space=vmem, size = 0x9000, scoped, tag = 'internal scratch']
  %s0 = inlined_call_operand.vmem [shape: f32[2,5,8,128], index: 0, kind: input, shape index: {}]
  %s1 = inlined_call_operand.vmem [shape: f32[5,5,128], index: 1, kind: input, shape index: {}]
  %s2 = inlined_call_operand.vmem [shape: f32[3,3,128], index: 2, kind: input, shape index: {}]
  %s3 = inlined_call_operand.vmem [shape: f32[1,128], index: 3, kind: input, shape index: {}]
  %s4 = inlined_call_operand.vmem [shape: f32[128,128], index: 4, kind: input, shape index: {}]
  %s5 = inlined_call_operand.vmem [shape: f32[1,128], index: 5, kind: input, shape index: {}]
  %s6 = inlined_call_operand.vmem [shape: f32[3,3,128], index: 6, kind: input, shape index: {}]
  %s7 = inlined_call_operand.vmem [shape: f32[1,128], index: 7, kind: input, shape index: {}]
  %s8 = inlined_call_operand.vmem [shape: f32[128,128], index: 8, kind: input, shape index: {}]
  %s9 = inlined_call_operand.vmem [shape: f32[1,128], index: 9, kind: input, shape index: {}]
  %s10 = inlined_call_operand.vmem [shape: f32[2,5,8,128], index: 10, kind: output, shape index: {}]
  %s11 = sld [smem:[#allocation0]]
  $region73: #{_lambda_.1} parent=0
    _
  %s13 = ssub.s32 1, %s11
  %s14 = scalar_select 0, %s13, %s11
  loop: start=0, step=1, limit=4
  $region2: #{_lambda_.1} parent=0 // loop_pre_header
    _
  $region3: #{_lambda_.1} parent=0 // loop_header
    %s16 = sphi 0, %s20
    %p17 = scmp.ge.s32.totalorder %s16, 4
    %s26 = sphi 0, %s28
    %s29 = sphi 0, %s26
    %s30 = sphi 0, %s29
    %s46 = sphi 0, %s30
    %s50 = sphi 0, %s50
    %s52 = sphi 0, %s50
    %s53 = sphi 0, %s52
    %s67 = sphi 0, %s53
    %s71 = sphi 0, %s71
    %s73 = sphi 0, %s71
    %s74 = sphi 0, %s73
    %s88 = sphi 0, %s74
    %s92 = sphi 0, %s92
    %s94 = sphi 0, %s92
    %s95 = sphi 0, %s94
    %s109 = sphi 0, %s95
    %s113 = sphi 0, %s113
    %s115 = sphi 0, %s113
    %s116 = sphi 0, %s115
    %s130 = sphi 0, %s116
    %s134 = sphi 0, %s134
    %s136 = sphi 0, %s134
    %s137 = sphi 0, %s136
    %s151 = sphi 0, %s137
    %s155 = sphi 0, %s155
    %s157 = sphi 0, %s155
    %s158 = sphi 0, %s157
    %s172 = sphi 0, %s158
    %s176 = sphi 0, %s176
    %s178 = sphi 0, %s176
    %s179 = sphi 0, %s178
    %s193 = sphi 0, %s179
    %s197 = sphi 0, %s197
    %s199 = sphi 0, %s197
    %s200 = sphi 0, %s199
    %s214 = sphi 0, %s200
    %s218 = sphi 0, %s218
    %s220 = sphi 0, %s218
    %s221 = sphi 0, %s220
    %s235 = sphi 0, %s221
    %s241 = sphi 0, %s243
    %s244 = sphi 0, %s241
    %s245 = sphi 0, %s244
    %s261 = sphi 0, %s245
  $region4: #{_lambda_.1} parent=0 // loop_header_branch
    %19 = sbr.rel (%p17) target = $region8
  $region5: #{_lambda_.1} parent=0 // loop_body
    %s21 = ssub.s32 %s16, 1
    %s22 = ssub.s32 %s16, 2
    %s23 = sadd.s32 %s16, 1
    %s24 = ssub.s32 %s16, %s23
    %p25 = scmp.eq.s32.totalorder %s24, 0
    %s27 = sadd.s32 %s26, 1
    %s28 = scalar_select %p25, %s26, %s27
    %p31 = pneg %p25
    %p32 = scmp.eq.s32.totalorder %s16, 1
    %p33 = por %p31, %p32
    %p34 = scmp.ne.s32.totalorder %s26, %s29
    %p35 = scmp.eq.s32.totalorder %s16, 0
    %p36 = por %p34, %p35
    %p37 = scmp.ne.s32.totalorder %s26, %s29
    %p38 = scmp.eq.s32.totalorder %s21, 1
    %p39 = por %p37, %p38
    %p40 = scmp.ne.s32.totalorder %s29, %s30
    %p41 = scmp.eq.s32.totalorder %s21, 0
    %p42 = por %p40, %p41
    %p43 = scmp.ne.s32.totalorder %s29, %s30
    %p44 = scmp.eq.s32.totalorder %s22, 1
    %p45 = por %p43, %p44
    %p47 = scmp.ne.s32.totalorder %s30, %s46
    %p48 = scmp.eq.s32.totalorder %s22, 0
    %p49 = por %p47, %p48
    %s51 = sadd.s32 %s50, 1
    %p54 = scmp.eq.s32.totalorder %s16, 1
    %p55 = scmp.ne.s32.totalorder %s50, %s52
    %p56 = scmp.eq.s32.totalorder %s16, 0
    %p57 = por %p55, %p56
    %p58 = scmp.ne.s32.totalorder %s50, %s52
    %p59 = scmp.eq.s32.totalorder %s21, 1
    %p60 = por %p58, %p59
    %p61 = scmp.ne.s32.totalorder %s52, %s53
    %p62 = scmp.eq.s32.totalorder %s21, 0
    %p63 = por %p61, %p62
    %p64 = scmp.ne.s32.totalorder %s52, %s53
    %p65 = scmp.eq.s32.totalorder %s22, 1
    %p66 = por %p64, %p65
    %p68 = scmp.ne.s32.totalorder %s53, %s67
    %p69 = scmp.eq.s32.totalorder %s22, 0
    %p70 = por %p68, %p69
    %s72 = sadd.s32 %s71, 1
    %p75 = scmp.eq.s32.totalorder %s16, 1
    %p76 = scmp.ne.s32.totalorder %s71, %s73
    %p77 = scmp.eq.s32.totalorder %s16, 0
    %p78 = por %p76, %p77
    %p79 = scmp.ne.s32.totalorder %s71, %s73
    %p80 = scmp.eq.s32.totalorder %s21, 1
    %p81 = por %p79, %p80
    %p82 = scmp.ne.s32.totalorder %s73, %s74
    %p83 = scmp.eq.s32.totalorder %s21, 0
    %p84 = por %p82, %p83
    %p85 = scmp.ne.s32.totalorder %s73, %s74
    %p86 = scmp.eq.s32.totalorder %s22, 1
    %p87 = por %p85, %p86
    %p89 = scmp.ne.s32.totalorder %s74, %s88
    %p90 = scmp.eq.s32.totalorder %s22, 0
    %p91 = por %p89, %p90
    %s93 = sadd.s32 %s92, 1
    %p96 = scmp.eq.s32.totalorder %s16, 1
    %p97 = scmp.ne.s32.totalorder %s92, %s94
    %p98 = scmp.eq.s32.totalorder %s16, 0
    %p99 = por %p97, %p98
    %p100 = scmp.ne.s32.totalorder %s92, %s94
    %p101 = scmp.eq.s32.totalorder %s21, 1
    %p102 = por %p100, %p101
    %p103 = scmp.ne.s32.totalorder %s94, %s95
    %p104 = scmp.eq.s32.totalorder %s21, 0
    %p105 = por %p103, %p104
    %p106 = scmp.ne.s32.totalorder %s94, %s95
    %p107 = scmp.eq.s32.totalorder %s22, 1
    %p108 = por %p106, %p107
    %p110 = scmp.ne.s32.totalorder %s95, %s109
    %p111 = scmp.eq.s32.totalorder %s22, 0
    %p112 = por %p110, %p111
    %s114 = sadd.s32 %s113, 1
    %p117 = scmp.eq.s32.totalorder %s16, 1
    %p118 = scmp.ne.s32.totalorder %s113, %s115
    %p119 = scmp.eq.s32.totalorder %s16, 0
    %p120 = por %p118, %p119
    %p121 = scmp.ne.s32.totalorder %s113, %s115
    %p122 = scmp.eq.s32.totalorder %s21, 1
    %p123 = por %p121, %p122
    %p124 = scmp.ne.s32.totalorder %s115, %s116
    %p125 = scmp.eq.s32.totalorder %s21, 0
    %p126 = por %p124, %p125
    %p127 = scmp.ne.s32.totalorder %s115, %s116
    %p128 = scmp.eq.s32.totalorder %s22, 1
    %p129 = por %p127, %p128
    %p131 = scmp.ne.s32.totalorder %s116, %s130
    %p132 = scmp.eq.s32.totalorder %s22, 0
    %p133 = por %p131, %p132
    %s135 = sadd.s32 %s134, 1
    %p138 = scmp.eq.s32.totalorder %s16, 1
    %p139 = scmp.ne.s32.totalorder %s134, %s136
    %p140 = scmp.eq.s32.totalorder %s16, 0
    %p141 = por %p139, %p140
    %p142 = scmp.ne.s32.totalorder %s134, %s136
    %p143 = scmp.eq.s32.totalorder %s21, 1
    %p144 = por %p142, %p143
    %p145 = scmp.ne.s32.totalorder %s136, %s137
    %p146 = scmp.eq.s32.totalorder %s21, 0
    %p147 = por %p145, %p146
    %p148 = scmp.ne.s32.totalorder %s136, %s137
    %p149 = scmp.eq.s32.totalorder %s22, 1
    %p150 = por %p148, %p149
    %p152 = scmp.ne.s32.totalorder %s137, %s151
    %p153 = scmp.eq.s32.totalorder %s22, 0
    %p154 = por %p152, %p153
    %s156 = sadd.s32 %s155, 1
    %p159 = scmp.eq.s32.totalorder %s16, 1
    %p160 = scmp.ne.s32.totalorder %s155, %s157
    %p161 = scmp.eq.s32.totalorder %s16, 0
    %p162 = por %p160, %p161
    %p163 = scmp.ne.s32.totalorder %s155, %s157
    %p164 = scmp.eq.s32.totalorder %s21, 1
    %p165 = por %p163, %p164
    %p166 = scmp.ne.s32.totalorder %s157, %s158
    %p167 = scmp.eq.s32.totalorder %s21, 0
    %p168 = por %p166, %p167
    %p169 = scmp.ne.s32.totalorder %s157, %s158
    %p170 = scmp.eq.s32.totalorder %s22, 1
    %p171 = por %p169, %p170
    %p173 = scmp.ne.s32.totalorder %s158, %s172
    %p174 = scmp.eq.s32.totalorder %s22, 0
    %p175 = por %p173, %p174
    %s177 = sadd.s32 %s176, 1
    %p180 = scmp.eq.s32.totalorder %s16, 1
    %p181 = scmp.ne.s32.totalorder %s176, %s178
    %p182 = scmp.eq.s32.totalorder %s16, 0
    %p183 = por %p181, %p182
    %p184 = scmp.ne.s32.totalorder %s176, %s178
    %p185 = scmp.eq.s32.totalorder %s21, 1
    %p186 = por %p184, %p185
    %p187 = scmp.ne.s32.totalorder %s178, %s179
    %p188 = scmp.eq.s32.totalorder %s21, 0
    %p189 = por %p187, %p188
    %p190 = scmp.ne.s32.totalorder %s178, %s179
    %p191 = scmp.eq.s32.totalorder %s22, 1
    %p192 = por %p190, %p191
    %p194 = scmp.ne.s32.totalorder %s179, %s193
    %p195 = scmp.eq.s32.totalorder %s22, 0
    %p196 = por %p194, %p195
    %s198 = sadd.s32 %s197, 1
    %p201 = scmp.eq.s32.totalorder %s16, 1
    %p202 = scmp.ne.s32.totalorder %s197, %s199
    %p203 = scmp.eq.s32.totalorder %s16, 0
    %p204 = por %p202, %p203
    %p205 = scmp.ne.s32.totalorder %s197, %s199
    %p206 = scmp.eq.s32.totalorder %s21, 1
    %p207 = por %p205, %p206
    %p208 = scmp.ne.s32.totalorder %s199, %s200
    %p209 = scmp.eq.s32.totalorder %s21, 0
    %p210 = por %p208, %p209
    %p211 = scmp.ne.s32.totalorder %s199, %s200
    %p212 = scmp.eq.s32.totalorder %s22, 1
    %p213 = por %p211, %p212
    %p215 = scmp.ne.s32.totalorder %s200, %s214
    %p216 = scmp.eq.s32.totalorder %s22, 0
    %p217 = por %p215, %p216
    %s219 = sadd.s32 %s218, 1
    %p222 = scmp.eq.s32.totalorder %s16, 1
    %p223 = scmp.ne.s32.totalorder %s218, %s220
    %p224 = scmp.eq.s32.totalorder %s16, 0
    %p225 = por %p223, %p224
    %p226 = scmp.ne.s32.totalorder %s218, %s220
    %p227 = scmp.eq.s32.totalorder %s21, 1
    %p228 = por %p226, %p227
    %p229 = scmp.ne.s32.totalorder %s220, %s221
    %p230 = scmp.eq.s32.totalorder %s21, 0
    %p231 = por %p229, %p230
    %p232 = scmp.ne.s32.totalorder %s220, %s221
    %p233 = scmp.eq.s32.totalorder %s22, 1
    %p234 = por %p232, %p233
    %p236 = scmp.ne.s32.totalorder %s221, %s235
    %p237 = scmp.eq.s32.totalorder %s22, 0
    %p238 = por %p236, %p237
    %s239 = ssub.s32 %s16, %s23
    %p240 = scmp.eq.s32.totalorder %s239, 0
    %s242 = sadd.s32 %s241, 1
    %s243 = scalar_select %p240, %s241, %s242
    %p246 = pneg %p240
    %p247 = scmp.eq.s32.totalorder %s16, 1
    %p248 = por %p246, %p247
    %p249 = scmp.ne.s32.totalorder %s241, %s244
    %p250 = scmp.eq.s32.totalorder %s16, 0
    %p251 = por %p249, %p250
    %p252 = scmp.ne.s32.totalorder %s241, %s244
    %p253 = scmp.eq.s32.totalorder %s21, 1
    %p254 = por %p252, %p253
    %p255 = scmp.ne.s32.totalorder %s244, %s245
    %p256 = scmp.eq.s32.totalorder %s21, 0
    %p257 = por %p255, %p256
    %p258 = scmp.ne.s32.totalorder %s244, %s245
    %p259 = scmp.eq.s32.totalorder %s22, 1
    %p260 = por %p258, %p259
    %p262 = scmp.ne.s32.totalorder %s245, %s261
    %p263 = scmp.eq.s32.totalorder %s22, 0
    %p264 = por %p262, %p263
    %p265 = scmp.le.s32.totalorder 1, %s16
    %p266 = scmp.lt.s32.totalorder %s16, 3
    %p267 = pnand %p265, %p266
    %p268 = pneg %p267
    // Predicated region
    $region9: #{_lambda_.1} parent=5 // pred_check
      _
    $region10: #{_lambda_.1} parent=5 // pred_check_branch
      %270 = sbr.rel (%p267) target = $region12
    $region11: #{_lambda_.1} parent=5 // pred_region
      %s271 = ssub.s32 %s16, 1
      // Predicated region
      $region13: #{_lambda_.1} parent=11 // pred_check
        %p272 = pneg %p63
      $region14: #{_lambda_.1} parent=11 // pred_check_branch
        %274 = sbr.rel (%p272) target = $region16
      $region15: #{_lambda_.1} parent=11 // pred_region
        _
      $region16: #{_lambda_.1} parent=11 // pred_fallthru
        _
      // Predicated region
      $region17: #{_lambda_.1} parent=11 // pred_check
        %p275 = pneg %p84
      $region18: #{_lambda_.1} parent=11 // pred_check_branch
        %277 = sbr.rel (%p275) target = $region20
      $region19: #{_lambda_.1} parent=11 // pred_region
        _
      $region20: #{_lambda_.1} parent=11 // pred_fallthru
        _
      // Predicated region
      $region21: #{_lambda_.1} parent=11 // pred_check
        %p278 = pneg %p105
      $region22: #{_lambda_.1} parent=11 // pred_check_branch
        %280 = sbr.rel (%p278) target = $region24
      $region23: #{_lambda_.1} parent=11 // pred_region
        _
      $region24: #{_lambda_.1} parent=11 // pred_fallthru
        _
      // Predicated region
      $region25: #{_lambda_.1} parent=11 // pred_check
        %p281 = pneg %p126
      $region26: #{_lambda_.1} parent=11 // pred_check_branch
        %283 = sbr.rel (%p281) target = $region28
      $region27: #{_lambda_.1} parent=11 // pred_region
        _
      $region28: #{_lambda_.1} parent=11 // pred_fallthru
        _
      // Predicated region
      $region29: #{_lambda_.1} parent=11 // pred_check
        %p284 = pneg %p147
      $region30: #{_lambda_.1} parent=11 // pred_check_branch
        %286 = sbr.rel (%p284) target = $region32
      $region31: #{_lambda_.1} parent=11 // pred_region
        _
      $region32: #{_lambda_.1} parent=11 // pred_fallthru
        _
      // Predicated region
      $region33: #{_lambda_.1} parent=11 // pred_check
        %p287 = pneg %p168
      $region34: #{_lambda_.1} parent=11 // pred_check_branch
        %289 = sbr.rel (%p287) target = $region36
      $region35: #{_lambda_.1} parent=11 // pred_region
        _
      $region36: #{_lambda_.1} parent=11 // pred_fallthru
        _
      // Predicated region
      $region37: #{_lambda_.1} parent=11 // pred_check
        %p290 = pneg %p189
      $region38: #{_lambda_.1} parent=11 // pred_check_branch
        %292 = sbr.rel (%p290) target = $region40
      $region39: #{_lambda_.1} parent=11 // pred_region
        _
      $region40: #{_lambda_.1} parent=11 // pred_fallthru
        _
      // Predicated region
      $region41: #{_lambda_.1} parent=11 // pred_check
        %p293 = pneg %p210
      $region42: #{_lambda_.1} parent=11 // pred_check_branch
        %295 = sbr.rel (%p293) target = $region44
      $region43: #{_lambda_.1} parent=11 // pred_region
        _
      $region44: #{_lambda_.1} parent=11 // pred_fallthru
        _
      // Predicated region
      $region45: #{_lambda_.1} parent=11 // pred_check
        %p296 = pneg %p231
      $region46: #{_lambda_.1} parent=11 // pred_check_branch
        %298 = sbr.rel (%p296) target = $region48
      $region47: #{_lambda_.1} parent=11 // pred_region
        _
      $region48: #{_lambda_.1} parent=11 // pred_fallthru
        _
    $region12: #{_lambda_.1} parent=5 // pred_fallthru
      _
    %p299 = scmp.lt.s32.totalorder %s16, 2
    // Predicated region
    $region49: #{_lambda_.1} parent=5 // pred_check
      %p300 = pneg %p299
    $region50: #{_lambda_.1} parent=5 // pred_check_branch
      %302 = sbr.rel (%p300) target = $region52
    $region51: #{_lambda_.1} parent=5 // pred_region
      // Predicated region
      $region53: #{_lambda_.1} parent=51 // pred_check
        %p303 = pneg %p36
      $region54: #{_lambda_.1} parent=51 // pred_check_branch
        %305 = sbr.rel (%p303) target = $region56
      $region55: #{_lambda_.1} parent=51 // pred_region
        %p306 = scmp.lt.s32.totalorder %s16, 1
        %s307 = scalar_select %p306, %s16, 1
        %s308 = smul.addr %s307, 5
        %s309 = smul.addr %s308, 8
        %s310 = scalar_lea.vmem %s0, %s309
      $region56: #{_lambda_.1} parent=51 // pred_fallthru
        _
    $region52: #{_lambda_.1} parent=5 // pred_fallthru
      _
    %p311 = scmp.le.s32.totalorder 1, %s16
    %p312 = scmp.lt.s32.totalorder %s16, 3
    %p313 = pnand %p311, %p312
    %p314 = pneg %p313
    // Predicated region
    $region57: #{_lambda_.1} parent=5 // pred_check
      _
    $region58: #{_lambda_.1} parent=5 // pred_check_branch
      %316 = sbr.rel (%p313) target = $region60
    $region59: #{_lambda_.1} parent=5 // pred_region
      %s317 = ssub.s32 %s16, 1
      %p318 = scmp.lt.s32.totalorder %s21, 1
      %s319 = scalar_select %p318, %s21, 1
      %s320 = smul.addr %s319, 5
      %s321 = smul.addr %s320, 8
      %s322 = scalar_lea.vmem %s0, %s321
      %p323 = pneg %p42
      %p324 = pneg %p39
      %p325 = pneg %p63
      %p326 = pneg %p60
      %p327 = pneg %p84
      %p328 = pneg %p81
      %p329 = pneg %p105
      %p330 = pneg %p102
      %p331 = pneg %p126
      %p332 = pneg %p123
      %p333 = pneg %p147
      %p334 = pneg %p144
      %p335 = pneg %p168
      %p336 = pneg %p165
      %p337 = pneg %p189
      %p338 = pneg %p186
      %p339 = pneg %p210
      %p340 = pneg %p207
      %p341 = pneg %p231
      %p342 = pneg %p228
      %p343 = pneg %p257
      %p344 = pneg %p254
      %p345 = scmp.lt.s32.totalorder %s21, 1
      %s346 = scalar_select %p345, %s21, 1
      %s347 = smul.addr %s346, 5
      %s348 = smul.addr %s347, 8
      %s349 = scalar_lea.vmem %s10, %s348
      %p350 = scmp.lt.s32.totalorder %s21, 1
      %s351 = scalar_select %p350, %s21, 1
      %s352 = smul.addr %s351, 5
      %s353 = smul.addr %s352, 8
      %s354 = scalar_lea.vmem %s0, %s353
      %p355 = scmp.lt.s32.totalorder %s21, 1
      %s356 = scalar_select %p355, %s21, 1
      %s357 = smul.addr %s356, 5
      %s358 = smul.addr %s357, 8
      %s359 = scalar_lea.vmem %s10, %s358
      %v360 = vld [vmem:[%s1] sm:$0x1f]
      %v361 = vld [vmem:[%s1 + $0x8] sm:$0x1f]
      %v362 = vld [vmem:[%s1 + $0x10] sm:$0x1f]
      %v363 = vld [vmem:[%s1 + $0x18] sm:$0x1f]
      %v364 = vld [vmem:[%s1 + $0x20] sm:$0x1f]
      %v366 = vrot.slane %v360, 1
      %v367 = vrot.slane %v360, 2
      %v368 = vrot.slane %v360, 3
      %v369 = vrot.slane %v360, 4
      %v371 = vrot.slane %v361, 1
      %v372 = vrot.slane %v361, 2
      %v373 = vrot.slane %v361, 3
      %v374 = vrot.slane %v361, 4
      %v376 = vrot.slane %v362, 1
      %v377 = vrot.slane %v362, 2
      %v378 = vrot.slane %v362, 3
      %v379 = vrot.slane %v362, 4
      %v381 = vrot.slane %v363, 1
      %v382 = vrot.slane %v363, 2
      %v383 = vrot.slane %v363, 3
      %v384 = vrot.slane %v363, 4
      %v386 = vrot.slane %v364, 1
      %v387 = vrot.slane %v364, 2
      %v388 = vrot.slane %v364, 3
      %v389 = vrot.slane %v364, 4
      %v390 = vlaneseq
      %v391 = vshrl.u32 %v390, 7
      %v392 = vlaneseq
      %v393 = vand.u32 %v392, 127
      %vm394 = vcmp.ge.s32.totalorder %v391, 1
      %vm395 = vcmp.lt.s32.totalorder %v391, 7
      %vm396 = vcmp.ge.s32.totalorder %v393, 16
      %vm397 = vcmp.lt.s32.totalorder %v393, 112
      %v398 = vld [vmem:[%s354] sm:$0xff]
      %v399 = vld [vmem:[%s354 + $0x8] sm:$0xff]
      %v400 = vld [vmem:[%s354 + $0x10] sm:$0xff]
      %v401 = vld [vmem:[%s354 + $0x18] sm:$0xff]
      %v402 = vld [vmem:[%s354 + $0x20] sm:$0xff]
      %v403 = vld [vmem:[%s2] sm:$0x7]
      %v404 = vld [vmem:[%s2 + $0x4] sm:$0x7]
      %v405 = vld [vmem:[%s2 + $0x8] sm:$0x7]
      %v406 = vld [vmem:[%s3] sm:$0x1]
      %v407 = vld [vmem:[%s4] sm:$0xff]
      %v408 = vld [vmem:[%s4 + $0x8] sm:$0xff]
      %v409 = vld [vmem:[%s4 + $0x10] sm:$0xff]
      %v410 = vld [vmem:[%s4 + $0x18] sm:$0xff]
      %v411 = vld [vmem:[%s4 + $0x20] sm:$0xff]
      %v412 = vld [vmem:[%s4 + $0x28] sm:$0xff]
      %v413 = vld [vmem:[%s4 + $0x30] sm:$0xff]
      %v414 = vld [vmem:[%s4 + $0x38] sm:$0xff]
      %v415 = vld [vmem:[%s4 + $0x40] sm:$0xff]
      %v416 = vld [vmem:[%s4 + $0x48] sm:$0xff]
      %v417 = vld [vmem:[%s4 + $0x50] sm:$0xff]
      %v418 = vld [vmem:[%s4 + $0x58] sm:$0xff]
      %v419 = vld [vmem:[%s4 + $0x60] sm:$0xff]
      %v420 = vld [vmem:[%s4 + $0x68] sm:$0xff]
      %v421 = vld [vmem:[%s4 + $0x70] sm:$0xff]
      %v422 = vld [vmem:[%s4 + $0x78] sm:$0xff]
      %v423 = vld [vmem:[%s5] sm:$0x1]
      %v424 = vperm.slane %v360, 0
      %v425 = vperm.slane %v366, 0
      %v426 = vperm.slane %v367, 0
      %v427 = vperm.slane %v368, 0
      %v428 = vperm.slane %v369, 0
      %v434 = vmul.f32 %v424, %v398
      %v435 = vmul.f32 %v425, %v398
      %v436 = vmul.f32 %v426, %v398
      %v437 = vmul.f32 %v427, %v398
      %v438 = vmul.f32 %v428, %v398
      %v439 = vperm.slane %v361, 0
      %v440 = vperm.slane %v371, 0
      %v441 = vperm.slane %v372, 0
      %v442 = vperm.slane %v373, 0
      %v443 = vperm.slane %v374, 0
      %v449 = vmul.f32 %v439, %v399
      %v450 = vmul.f32 %v440, %v399
      %v451 = vmul.f32 %v441, %v399
      %v452 = vmul.f32 %v442, %v399
      %v453 = vmul.f32 %v443, %v399
      %v454 = vadd.f32 %v434, %v449
      %v455 = vadd.f32 %v435, %v450
      %v456 = vadd.f32 %v436, %v451
      %v457 = vadd.f32 %v437, %v452
      %v458 = vadd.f32 %v438, %v453
      %v459 = vperm.slane %v362, 0
      %v460 = vperm.slane %v376, 0
      %v461 = vperm.slane %v377, 0
      %v462 = vperm.slane %v378, 0
      %v463 = vperm.slane %v379, 0
      %v469 = vmul.f32 %v459, %v400
      %v470 = vmul.f32 %v460, %v400
      %v471 = vmul.f32 %v461, %v400
      %v472 = vmul.f32 %v462, %v400
      %v473 = vmul.f32 %v463, %v400
      %v474 = vadd.f32 %v454, %v469
      %v475 = vadd.f32 %v455, %v470
      %v476 = vadd.f32 %v456, %v471
      %v477 = vadd.f32 %v457, %v472
      %v478 = vadd.f32 %v458, %v473
      %v479 = vperm.slane %v363, 0
      %v480 = vperm.slane %v381, 0
      %v481 = vperm.slane %v382, 0
      %v482 = vperm.slane %v383, 0
      %v483 = vperm.slane %v384, 0
      %v489 = vmul.f32 %v479, %v401
      %v490 = vmul.f32 %v480, %v401
      %v491 = vmul.f32 %v481, %v401
      %v492 = vmul.f32 %v482, %v401
      %v493 = vmul.f32 %v483, %v401
      %v494 = vadd.f32 %v474, %v489
      %v495 = vadd.f32 %v475, %v490
      %v496 = vadd.f32 %v476, %v491
      %v497 = vadd.f32 %v477, %v492
      %v498 = vadd.f32 %v478, %v493
      %v499 = vperm.slane %v364, 0
      %v500 = vperm.slane %v386, 0
      %v501 = vperm.slane %v387, 0
      %v502 = vperm.slane %v388, 0
      %v503 = vperm.slane %v389, 0
      %v509 = vmul.f32 %v499, %v402
      %v510 = vmul.f32 %v500, %v402
      %v511 = vmul.f32 %v501, %v402
      %v512 = vmul.f32 %v502, %v402
      %v513 = vmul.f32 %v503, %v402
      %v514 = vadd.f32 %v494, %v509
      %v515 = vadd.f32 %v495, %v510
      %v516 = vadd.f32 %v496, %v511
      %v517 = vadd.f32 %v497, %v512
      %v518 = vadd.f32 %v498, %v513
      %v519 = vperm.slane %v404, 1
      %v520 = vmul.f32 %v514, %v519
      %v521 = vmul.f32 %v515, %v519
      %v522 = vmul.f32 %v516, %v519
      %v523 = vmul.f32 %v517, %v519
      %v524 = vmul.f32 %v518, %v519
      %v526 = vperm.slane %v406, 0
      %v528 = vadd.f32 %v520, %v526
      %v529 = vadd.f32 %v521, %v526
      %v530 = vadd.f32 %v522, %v526
      %v531 = vadd.f32 %v523, %v526
      %v532 = vadd.f32 %v524, %v526
      %v533 = vrot.slane %v514, 7
      %v534 = vrot.slane %v515, 7
      %v535 = vrot.slane %v516, 7
      %v536 = vrot.slane %v517, 7
      %v537 = vrot.slane %v518, 7
      %v538 = vsel %vm394, 1, 0
      %vm539 = vcmp.eq.s32.totalorder %v538, 1
      %v540 = vsel %vm539, %v533, 0.0
      %v541 = vsel %vm539, %v534, 0.0
      %v542 = vsel %vm539, %v535, 0.0
      %v543 = vsel %vm539, %v536, 0.0
      %v544 = vsel %vm539, %v537, 0.0
      %545 = vrot.lane.b32.xlu0 %v540, 16
      %v546 = vpop.permute.xlu0 %545
      %547 = vrot.lane.b32.xlu0 %v541, 16
      %v548 = vpop.permute.xlu0 %547
      %549 = vrot.lane.b32.xlu0 %v542, 16
      %v550 = vpop.permute.xlu0 %549
      %551 = vrot.lane.b32.xlu0 %v543, 16
      %v552 = vpop.permute.xlu0 %551
      %553 = vrot.lane.b32.xlu0 %v544, 16
      %v554 = vpop.permute.xlu0 %553
      %v555 = vsel %vm396, 1, 0
      %vm556 = vcmp.eq.s32.totalorder %v555, 1
      %v557 = vsel %vm556, %v546, 0.0
      %v558 = vsel %vm556, %v548, 0.0
      %v559 = vsel %vm556, %v550, 0.0
      %v560 = vsel %vm556, %v552, 0.0
      %v561 = vsel %vm556, %v554, 0.0
      %v562 = vperm.slane %v403, 0
      %v563 = vmul.f32 %v557, %v562
      %v564 = vmul.f32 %v558, %v562
      %v565 = vmul.f32 %v559, %v562
      %v566 = vmul.f32 %v560, %v562
      %v567 = vmul.f32 %v561, %v562
      %v568 = vadd.f32 %v528, %v563
      %v569 = vadd.f32 %v529, %v564
      %v570 = vadd.f32 %v530, %v565
      %v571 = vadd.f32 %v531, %v566
      %v572 = vadd.f32 %v532, %v567
      %v573 = vperm.slane %v403, 1
      %v574 = vmul.f32 %v540, %v573
      %v575 = vmul.f32 %v541, %v573
      %v576 = vmul.f32 %v542, %v573
      %v577 = vmul.f32 %v543, %v573
      %v578 = vmul.f32 %v544, %v573
      %v579 = vadd.f32 %v568, %v574
      %v580 = vadd.f32 %v569, %v575
      %v581 = vadd.f32 %v570, %v576
      %v582 = vadd.f32 %v571, %v577
      %v583 = vadd.f32 %v572, %v578
      %584 = vrot.lane.b32.xlu0 %v540, 112
      %v585 = vpop.permute.xlu0 %584
      %586 = vrot.lane.b32.xlu0 %v541, 112
      %v587 = vpop.permute.xlu0 %586
      %588 = vrot.lane.b32.xlu0 %v542, 112
      %v589 = vpop.permute.xlu0 %588
      %590 = vrot.lane.b32.xlu0 %v543, 112
      %v591 = vpop.permute.xlu0 %590
      %592 = vrot.lane.b32.xlu0 %v544, 112
      %v593 = vpop.permute.xlu0 %592
      %v594 = vsel %vm397, 1, 0
      %vm595 = vcmp.eq.s32.totalorder %v594, 1
      %v596 = vsel %vm595, %v585, 0.0
      %v597 = vsel %vm595, %v587, 0.0
      %v598 = vsel %vm595, %v589, 0.0
      %v599 = vsel %vm595, %v591, 0.0
      %v600 = vsel %vm595, %v593, 0.0
      %v601 = vperm.slane %v403, 2
      %v602 = vmul.f32 %v596, %v601
      %v603 = vmul.f32 %v597, %v601
      %v604 = vmul.f32 %v598, %v601
      %v605 = vmul.f32 %v599, %v601
      %v606 = vmul.f32 %v600, %v601
      %v607 = vadd.f32 %v579, %v602
      %v608 = vadd.f32 %v580, %v603
      %v609 = vadd.f32 %v581, %v604
      %v610 = vadd.f32 %v582, %v605
      %v611 = vadd.f32 %v583, %v606
      %612 = vrot.lane.b32.xlu0 %v514, 16
      %v613 = vpop.permute.xlu0 %612
      %614 = vrot.lane.b32.xlu0 %v515, 16
      %v615 = vpop.permute.xlu0 %614
      %616 = vrot.lane.b32.xlu0 %v516, 16
      %v617 = vpop.permute.xlu0 %616
      %618 = vrot.lane.b32.xlu0 %v517, 16
      %v619 = vpop.permute.xlu0 %618
      %620 = vrot.lane.b32.xlu0 %v518, 16
      %v621 = vpop.permute.xlu0 %620
      %v622 = vsel %vm556, %v613, 0.0
      %v623 = vsel %vm556, %v615, 0.0
      %v624 = vsel %vm556, %v617, 0.0
      %v625 = vsel %vm556, %v619, 0.0
      %v626 = vsel %vm556, %v621, 0.0
      %v627 = vperm.slane %v404, 0
      %v628 = vmul.f32 %v622, %v627
      %v629 = vmul.f32 %v623, %v627
      %v630 = vmul.f32 %v624, %v627
      %v631 = vmul.f32 %v625, %v627
      %v632 = vmul.f32 %v626, %v627
      %v633 = vadd.f32 %v607, %v628
      %v634 = vadd.f32 %v608, %v629
      %v635 = vadd.f32 %v609, %v630
      %v636 = vadd.f32 %v610, %v631
      %v637 = vadd.f32 %v611, %v632
      %638 = vrot.lane.b32.xlu0 %v514, 112
      %v639 = vpop.permute.xlu0 %638
      %640 = vrot.lane.b32.xlu0 %v515, 112
      %v641 = vpop.permute.xlu0 %640
      %642 = vrot.lane.b32.xlu0 %v516, 112
      %v643 = vpop.permute.xlu0 %642
      %644 = vrot.lane.b32.xlu0 %v517, 112
      %v645 = vpop.permute.xlu0 %644
      %646 = vrot.lane.b32.xlu0 %v518, 112
      %v647 = vpop.permute.xlu0 %646
      %v648 = vsel %vm595, %v639, 0.0
      %v649 = vsel %vm595, %v641, 0.0
      %v650 = vsel %vm595, %v643, 0.0
      %v651 = vsel %vm595, %v645, 0.0
      %v652 = vsel %vm595, %v647, 0.0
      %v653 = vperm.slane %v404, 2
      %v654 = vmul.f32 %v648, %v653
      %v655 = vmul.f32 %v649, %v653
      %v656 = vmul.f32 %v650, %v653
      %v657 = vmul.f32 %v651, %v653
      %v658 = vmul.f32 %v652, %v653
      %v659 = vadd.f32 %v633, %v654
      %v660 = vadd.f32 %v634, %v655
      %v661 = vadd.f32 %v635, %v656
      %v662 = vadd.f32 %v636, %v657
      %v663 = vadd.f32 %v637, %v658
      %v664 = vrot.slane %v514, 1
      %v665 = vrot.slane %v515, 1
      %v666 = vrot.slane %v516, 1
      %v667 = vrot.slane %v517, 1
      %v668 = vrot.slane %v518, 1
      %v669 = vsel %vm395, 1, 0
      %vm670 = vcmp.eq.s32.totalorder %v669, 1
      %v671 = vsel %vm670, %v664, 0.0
      %v672 = vsel %vm670, %v665, 0.0
      %v673 = vsel %vm670, %v666, 0.0
      %v674 = vsel %vm670, %v667, 0.0
      %v675 = vsel %vm670, %v668, 0.0
      %676 = vrot.lane.b32.xlu0 %v671, 16
      %v677 = vpop.permute.xlu0 %676
      %678 = vrot.lane.b32.xlu0 %v672, 16
      %v679 = vpop.permute.xlu0 %678
      %680 = vrot.lane.b32.xlu0 %v673, 16
      %v681 = vpop.permute.xlu0 %680
      %682 = vrot.lane.b32.xlu0 %v674, 16
      %v683 = vpop.permute.xlu0 %682
      %684 = vrot.lane.b32.xlu0 %v675, 16
      %v685 = vpop.permute.xlu0 %684
      %v686 = vsel %vm556, %v677, 0.0
      %v687 = vsel %vm556, %v679, 0.0
      %v688 = vsel %vm556, %v681, 0.0
      %v689 = vsel %vm556, %v683, 0.0
      %v690 = vsel %vm556, %v685, 0.0
      %v691 = vperm.slane %v405, 0
      %v692 = vmul.f32 %v686, %v691
      %v693 = vmul.f32 %v687, %v691
      %v694 = vmul.f32 %v688, %v691
      %v695 = vmul.f32 %v689, %v691
      %v696 = vmul.f32 %v690, %v691
      %v697 = vadd.f32 %v659, %v692
      %v698 = vadd.f32 %v660, %v693
      %v699 = vadd.f32 %v661, %v694
      %v700 = vadd.f32 %v662, %v695
      %v701 = vadd.f32 %v663, %v696
      %v702 = vperm.slane %v405, 1
      %v703 = vmul.f32 %v671, %v702
      %v704 = vmul.f32 %v672, %v702
      %v705 = vmul.f32 %v673, %v702
      %v706 = vmul.f32 %v674, %v702
      %v707 = vmul.f32 %v675, %v702
      %v708 = vadd.f32 %v697, %v703
      %v709 = vadd.f32 %v698, %v704
      %v710 = vadd.f32 %v699, %v705
      %v711 = vadd.f32 %v700, %v706
      %v712 = vadd.f32 %v701, %v707
      %713 = vrot.lane.b32.xlu0 %v671, 112
      %v714 = vpop.permute.xlu0 %713
      %715 = vrot.lane.b32.xlu0 %v672, 112
      %v716 = vpop.permute.xlu0 %715
      %717 = vrot.lane.b32.xlu0 %v673, 112
      %v718 = vpop.permute.xlu0 %717
      %719 = vrot.lane.b32.xlu0 %v674, 112
      %v720 = vpop.permute.xlu0 %719
      %721 = vrot.lane.b32.xlu0 %v675, 112
      %v722 = vpop.permute.xlu0 %721
      %v723 = vsel %vm595, %v714, 0.0
      %v724 = vsel %vm595, %v716, 0.0
      %v725 = vsel %vm595, %v718, 0.0
      %v726 = vsel %vm595, %v720, 0.0
      %v727 = vsel %vm595, %v722, 0.0
      %v728 = vperm.slane %v405, 2
      %v729 = vmul.f32 %v723, %v728
      %v730 = vmul.f32 %v724, %v728
      %v731 = vmul.f32 %v725, %v728
      %v732 = vmul.f32 %v726, %v728
      %v733 = vmul.f32 %v727, %v728
      %v734 = vadd.f32 %v708, %v729
      %v735 = vadd.f32 %v709, %v730
      %v736 = vadd.f32 %v710, %v731
      %v737 = vadd.f32 %v711, %v732
      %v738 = vadd.f32 %v712, %v733
      %v740 = vperm.slane %v423, 0
      %742 = vmatpush.msra.mxu0 %v422
      %743 = vmatpush.msra.mxu0 %v421
      %744 = vmatpush.msra.mxu0 %v420
      %745 = vmatpush.msra.mxu0 %v419
      %746 = vmatpush.msra.mxu0 %v418
      %747 = vmatpush.msra.mxu0 %v417
      %748 = vmatpush.msra.mxu0 %v416
      %749 = vmatpush.msra.mxu0 %v415
      %750 = vmatpush.msra.mxu0 %v414
      %751 = vmatpush.msra.mxu0 %v413
      %752 = vmatpush.msra.mxu0 %v412
      %753 = vmatpush.msra.mxu0 %v411
      %754 = vmatpush.msra.mxu0 %v410
      %755 = vmatpush.msra.mxu0 %v409
      %756 = vmatpush.msra.mxu0 %v408
      %757 = vmatpush.msra.mxu0 %v407
      %758 = vmatmul.f32.gmra.mxu0 %v734
      %v759 = vpop.f32.mrf.mxu0
      %v760 = vadd.f32 %v740, %v759
      %761 = vmatmul.f32.gmra.mxu0 %v735
      %v762 = vpop.f32.mrf.mxu0
      %v763 = vadd.f32 %v740, %v762
      %764 = vmatmul.f32.gmra.mxu0 %v736
      %v765 = vpop.f32.mrf.mxu0
      %v766 = vadd.f32 %v740, %v765
      %767 = vmatmul.f32.gmra.mxu0 %v737
      %v768 = vpop.f32.mrf.mxu0
      %v769 = vadd.f32 %v740, %v768
      %770 = vmatmul.f32.gmra.mxu0 %v738
      %v771 = vpop.f32.mrf.mxu0
      %v772 = vadd.f32 %v740, %v771
      %773 = vdwg.mxu0
      %v774 = vld [vmem:[%s6] sm:$0x7]
      %v775 = vld [vmem:[%s6 + $0x4] sm:$0x7]
      %v776 = vld [vmem:[%s6 + $0x8] sm:$0x7]
      %v777 = vld [vmem:[%s7] sm:$0x1]
      %v778 = vld [vmem:[%s8] sm:$0xff]
      %v779 = vld [vmem:[%s8 + $0x8] sm:$0xff]
      %v780 = vld [vmem:[%s8 + $0x10] sm:$0xff]
      %v781 = vld [vmem:[%s8 + $0x18] sm:$0xff]
      %v782 = vld [vmem:[%s8 + $0x20] sm:$0xff]
      %v783 = vld [vmem:[%s8 + $0x28] sm:$0xff]
      %v784 = vld [vmem:[%s8 + $0x30] sm:$0xff]
      %v785 = vld [vmem:[%s8 + $0x38] sm:$0xff]
      %v786 = vld [vmem:[%s8 + $0x40] sm:$0xff]
      %v787 = vld [vmem:[%s8 + $0x48] sm:$0xff]
      %v788 = vld [vmem:[%s8 + $0x50] sm:$0xff]
      %v789 = vld [vmem:[%s8 + $0x58] sm:$0xff]
      %v790 = vld [vmem:[%s8 + $0x60] sm:$0xff]
      %v791 = vld [vmem:[%s8 + $0x68] sm:$0xff]
      %v792 = vld [vmem:[%s8 + $0x70] sm:$0xff]
      %v793 = vld [vmem:[%s8 + $0x78] sm:$0xff]
      %v794 = vld [vmem:[%s9] sm:$0x1]
      %v795 = vmul.f32 %v424, %v760
      %v796 = vmul.f32 %v425, %v760
      %v797 = vmul.f32 %v426, %v760
      %v798 = vmul.f32 %v427, %v760
      %v799 = vmul.f32 %v428, %v760
      %v800 = vmul.f32 %v439, %v763
      %v801 = vmul.f32 %v440, %v763
      %v802 = vmul.f32 %v441, %v763
      %v803 = vmul.f32 %v442, %v763
      %v804 = vmul.f32 %v443, %v763
      %v805 = vadd.f32 %v795, %v800
      %v806 = vadd.f32 %v796, %v801
      %v807 = vadd.f32 %v797, %v802
      %v808 = vadd.f32 %v798, %v803
      %v809 = vadd.f32 %v799, %v804
      %v810 = vmul.f32 %v459, %v766
      %v811 = vmul.f32 %v460, %v766
      %v812 = vmul.f32 %v461, %v766
      %v813 = vmul.f32 %v462, %v766
      %v814 = vmul.f32 %v463, %v766
      %v815 = vadd.f32 %v805, %v810
      %v816 = vadd.f32 %v806, %v811
      %v817 = vadd.f32 %v807, %v812
      %v818 = vadd.f32 %v808, %v813
      %v819 = vadd.f32 %v809, %v814
      %v820 = vmul.f32 %v479, %v769
      %v821 = vmul.f32 %v480, %v769
      %v822 = vmul.f32 %v481, %v769
      %v823 = vmul.f32 %v482, %v769
      %v824 = vmul.f32 %v483, %v769
      %v825 = vadd.f32 %v815, %v820
      %v826 = vadd.f32 %v816, %v821
      %v827 = vadd.f32 %v817, %v822
      %v828 = vadd.f32 %v818, %v823
      %v829 = vadd.f32 %v819, %v824
      %v830 = vmul.f32 %v499, %v772
      %v831 = vmul.f32 %v500, %v772
      %v832 = vmul.f32 %v501, %v772
      %v833 = vmul.f32 %v502, %v772
      %v834 = vmul.f32 %v503, %v772
      %v835 = vadd.f32 %v825, %v830
      %v836 = vadd.f32 %v826, %v831
      %v837 = vadd.f32 %v827, %v832
      %v838 = vadd.f32 %v828, %v833
      %v839 = vadd.f32 %v829, %v834
      %v840 = vperm.slane %v775, 1
      %v841 = vmul.f32 %v835, %v840
      %v842 = vmul.f32 %v836, %v840
      %v843 = vmul.f32 %v837, %v840
      %v844 = vmul.f32 %v838, %v840
      %v845 = vmul.f32 %v839, %v840
      %v847 = vperm.slane %v777, 0
      %v849 = vadd.f32 %v841, %v847
      %v850 = vadd.f32 %v842, %v847
      %v851 = vadd.f32 %v843, %v847
      %v852 = vadd.f32 %v844, %v847
      %v853 = vadd.f32 %v845, %v847
      %v854 = vrot.slane %v835, 7
      %v855 = vrot.slane %v836, 7
      %v856 = vrot.slane %v837, 7
      %v857 = vrot.slane %v838, 7
      %v858 = vrot.slane %v839, 7
      %v859 = vsel %vm539, %v854, 0.0
      %v860 = vsel %vm539, %v855, 0.0
      %v861 = vsel %vm539, %v856, 0.0
      %v862 = vsel %vm539, %v857, 0.0
      %v863 = vsel %vm539, %v858, 0.0
      %864 = vrot.lane.b32.xlu0 %v859, 16
      %v865 = vpop.permute.xlu0 %864
      %866 = vrot.lane.b32.xlu0 %v860, 16
      %v867 = vpop.permute.xlu0 %866
      %868 = vrot.lane.b32.xlu0 %v861, 16
      %v869 = vpop.permute.xlu0 %868
      %870 = vrot.lane.b32.xlu0 %v862, 16
      %v871 = vpop.permute.xlu0 %870
      %872 = vrot.lane.b32.xlu0 %v863, 16
      %v873 = vpop.permute.xlu0 %872
      %v874 = vsel %vm556, %v865, 0.0
      %v875 = vsel %vm556, %v867, 0.0
      %v876 = vsel %vm556, %v869, 0.0
      %v877 = vsel %vm556, %v871, 0.0
      %v878 = vsel %vm556, %v873, 0.0
      %v879 = vperm.slane %v774, 0
      %v880 = vmul.f32 %v874, %v879
      %v881 = vmul.f32 %v875, %v879
      %v882 = vmul.f32 %v876, %v879
      %v883 = vmul.f32 %v877, %v879
      %v884 = vmul.f32 %v878, %v879
      %v885 = vadd.f32 %v849, %v880
      %v886 = vadd.f32 %v850, %v881
      %v887 = vadd.f32 %v851, %v882
      %v888 = vadd.f32 %v852, %v883
      %v889 = vadd.f32 %v853, %v884
      %v890 = vperm.slane %v774, 1
      %v891 = vmul.f32 %v859, %v890
      %v892 = vmul.f32 %v860, %v890
      %v893 = vmul.f32 %v861, %v890
      %v894 = vmul.f32 %v862, %v890
      %v895 = vmul.f32 %v863, %v890
      %v896 = vadd.f32 %v885, %v891
      %v897 = vadd.f32 %v886, %v892
      %v898 = vadd.f32 %v887, %v893
      %v899 = vadd.f32 %v888, %v894
      %v900 = vadd.f32 %v889, %v895
      %901 = vrot.lane.b32.xlu0 %v859, 112
      %v902 = vpop.permute.xlu0 %901
      %903 = vrot.lane.b32.xlu0 %v860, 112
      %v904 = vpop.permute.xlu0 %903
      %905 = vrot.lane.b32.xlu0 %v861, 112
      %v906 = vpop.permute.xlu0 %905
      %907 = vrot.lane.b32.xlu0 %v862, 112
      %v908 = vpop.permute.xlu0 %907
      %909 = vrot.lane.b32.xlu0 %v863, 112
      %v910 = vpop.permute.xlu0 %909
      %v911 = vsel %vm595, %v902, 0.0
      %v912 = vsel %vm595, %v904, 0.0
      %v913 = vsel %vm595, %v906, 0.0
      %v914 = vsel %vm595, %v908, 0.0
      %v915 = vsel %vm595, %v910, 0.0
      %v916 = vperm.slane %v774, 2
      %v917 = vmul.f32 %v911, %v916
      %v918 = vmul.f32 %v912, %v916
      %v919 = vmul.f32 %v913, %v916
      %v920 = vmul.f32 %v914, %v916
      %v921 = vmul.f32 %v915, %v916
      %v922 = vadd.f32 %v896, %v917
      %v923 = vadd.f32 %v897, %v918
      %v924 = vadd.f32 %v898, %v919
      %v925 = vadd.f32 %v899, %v920
      %v926 = vadd.f32 %v900, %v921
      %927 = vrot.lane.b32.xlu0 %v835, 16
      %v928 = vpop.permute.xlu0 %927
      %929 = vrot.lane.b32.xlu0 %v836, 16
      %v930 = vpop.permute.xlu0 %929
      %931 = vrot.lane.b32.xlu0 %v837, 16
      %v932 = vpop.permute.xlu0 %931
      %933 = vrot.lane.b32.xlu0 %v838, 16
      %v934 = vpop.permute.xlu0 %933
      %935 = vrot.lane.b32.xlu0 %v839, 16
      %v936 = vpop.permute.xlu0 %935
      %v937 = vsel %vm556, %v928, 0.0
      %v938 = vsel %vm556, %v930, 0.0
      %v939 = vsel %vm556, %v932, 0.0
      %v940 = vsel %vm556, %v934, 0.0
      %v941 = vsel %vm556, %v936, 0.0
      %v942 = vperm.slane %v775, 0
      %v943 = vmul.f32 %v937, %v942
      %v944 = vmul.f32 %v938, %v942
      %v945 = vmul.f32 %v939, %v942
      %v946 = vmul.f32 %v940, %v942
      %v947 = vmul.f32 %v941, %v942
      %v948 = vadd.f32 %v922, %v943
      %v949 = vadd.f32 %v923, %v944
      %v950 = vadd.f32 %v924, %v945
      %v951 = vadd.f32 %v925, %v946
      %v952 = vadd.f32 %v926, %v947
      %953 = vrot.lane.b32.xlu0 %v835, 112
      %v954 = vpop.permute.xlu0 %953
      %955 = vrot.lane.b32.xlu0 %v836, 112
      %v956 = vpop.permute.xlu0 %955
      %957 = vrot.lane.b32.xlu0 %v837, 112
      %v958 = vpop.permute.xlu0 %957
      %959 = vrot.lane.b32.xlu0 %v838, 112
      %v960 = vpop.permute.xlu0 %959
      %961 = vrot.lane.b32.xlu0 %v839, 112
      %v962 = vpop.permute.xlu0 %961
      %v963 = vsel %vm595, %v954, 0.0
      %v964 = vsel %vm595, %v956, 0.0
      %v965 = vsel %vm595, %v958, 0.0
      %v966 = vsel %vm595, %v960, 0.0
      %v967 = vsel %vm595, %v962, 0.0
      %v968 = vperm.slane %v775, 2
      %v969 = vmul.f32 %v963, %v968
      %v970 = vmul.f32 %v964, %v968
      %v971 = vmul.f32 %v965, %v968
      %v972 = vmul.f32 %v966, %v968
      %v973 = vmul.f32 %v967, %v968
      %v974 = vadd.f32 %v948, %v969
      %v975 = vadd.f32 %v949, %v970
      %v976 = vadd.f32 %v950, %v971
      %v977 = vadd.f32 %v951, %v972
      %v978 = vadd.f32 %v952, %v973
      %v979 = vrot.slane %v835, 1
      %v980 = vrot.slane %v836, 1
      %v981 = vrot.slane %v837, 1
      %v982 = vrot.slane %v838, 1
      %v983 = vrot.slane %v839, 1
      %v984 = vsel %vm670, %v979, 0.0
      %v985 = vsel %vm670, %v980, 0.0
      %v986 = vsel %vm670, %v981, 0.0
      %v987 = vsel %vm670, %v982, 0.0
      %v988 = vsel %vm670, %v983, 0.0
      %989 = vrot.lane.b32.xlu0 %v984, 16
      %v990 = vpop.permute.xlu0 %989
      %991 = vrot.lane.b32.xlu0 %v985, 16
      %v992 = vpop.permute.xlu0 %991
      %993 = vrot.lane.b32.xlu0 %v986, 16
      %v994 = vpop.permute.xlu0 %993
      %995 = vrot.lane.b32.xlu0 %v987, 16
      %v996 = vpop.permute.xlu0 %995
      %997 = vrot.lane.b32.xlu0 %v988, 16
      %v998 = vpop.permute.xlu0 %997
      %v999 = vsel %vm556, %v990, 0.0
      %v1000 = vsel %vm556, %v992, 0.0
      %v1001 = vsel %vm556, %v994, 0.0
      %v1002 = vsel %vm556, %v996, 0.0
      %v1003 = vsel %vm556, %v998, 0.0
      %v1004 = vperm.slane %v776, 0
      %v1005 = vmul.f32 %v999, %v1004
      %v1006 = vmul.f32 %v1000, %v1004
      %v1007 = vmul.f32 %v1001, %v1004
      %v1008 = vmul.f32 %v1002, %v1004
      %v1009 = vmul.f32 %v1003, %v1004
      %v1010 = vadd.f32 %v974, %v1005
      %v1011 = vadd.f32 %v975, %v1006
      %v1012 = vadd.f32 %v976, %v1007
      %v1013 = vadd.f32 %v977, %v1008
      %v1014 = vadd.f32 %v978, %v1009
      %v1015 = vperm.slane %v776, 1
      %v1016 = vmul.f32 %v984, %v1015
      %v1017 = vmul.f32 %v985, %v1015
      %v1018 = vmul.f32 %v986, %v1015
      %v1019 = vmul.f32 %v987, %v1015
      %v1020 = vmul.f32 %v988, %v1015
      %v1021 = vadd.f32 %v1010, %v1016
      %v1022 = vadd.f32 %v1011, %v1017
      %v1023 = vadd.f32 %v1012, %v1018
      %v1024 = vadd.f32 %v1013, %v1019
      %v1025 = vadd.f32 %v1014, %v1020
      %1026 = vrot.lane.b32.xlu0 %v984, 112
      %v1027 = vpop.permute.xlu0 %1026
      %1028 = vrot.lane.b32.xlu0 %v985, 112
      %v1029 = vpop.permute.xlu0 %1028
      %1030 = vrot.lane.b32.xlu0 %v986, 112
      %v1031 = vpop.permute.xlu0 %1030
      %1032 = vrot.lane.b32.xlu0 %v987, 112
      %v1033 = vpop.permute.xlu0 %1032
      %1034 = vrot.lane.b32.xlu0 %v988, 112
      %v1035 = vpop.permute.xlu0 %1034
      %v1036 = vsel %vm595, %v1027, 0.0
      %v1037 = vsel %vm595, %v1029, 0.0
      %v1038 = vsel %vm595, %v1031, 0.0
      %v1039 = vsel %vm595, %v1033, 0.0
      %v1040 = vsel %vm595, %v1035, 0.0
      %v1041 = vperm.slane %v776, 2
      %v1042 = vmul.f32 %v1036, %v1041
      %v1043 = vmul.f32 %v1037, %v1041
      %v1044 = vmul.f32 %v1038, %v1041
      %v1045 = vmul.f32 %v1039, %v1041
      %v1046 = vmul.f32 %v1040, %v1041
      %v1047 = vadd.f32 %v1021, %v1042
      %v1048 = vadd.f32 %v1022, %v1043
      %v1049 = vadd.f32 %v1023, %v1044
      %v1050 = vadd.f32 %v1024, %v1045
      %v1051 = vadd.f32 %v1025, %v1046
      %v1053 = vperm.slane %v794, 0
      %1055 = vmatpush.msra.mxu0 %v793
      %1056 = vmatpush.msra.mxu0 %v792
      %1057 = vmatpush.msra.mxu0 %v791
      %1058 = vmatpush.msra.mxu0 %v790
      %1059 = vmatpush.msra.mxu0 %v789
      %1060 = vmatpush.msra.mxu0 %v788
      %1061 = vmatpush.msra.mxu0 %v787
      %1062 = vmatpush.msra.mxu0 %v786
      %1063 = vmatpush.msra.mxu0 %v785
      %1064 = vmatpush.msra.mxu0 %v784
      %1065 = vmatpush.msra.mxu0 %v783
      %1066 = vmatpush.msra.mxu0 %v782
      %1067 = vmatpush.msra.mxu0 %v781
      %1068 = vmatpush.msra.mxu0 %v780
      %1069 = vmatpush.msra.mxu0 %v779
      %1070 = vmatpush.msra.mxu0 %v778
      %1071 = vmatmul.f32.gmra.mxu0 %v1047
      %v1072 = vpop.f32.mrf.mxu0
      %v1073 = vadd.f32 %v1053, %v1072
      %1074 = vmatmul.f32.gmra.mxu0 %v1048
      %v1075 = vpop.f32.mrf.mxu0
      %v1076 = vadd.f32 %v1053, %v1075
      %1077 = vmatmul.f32.gmra.mxu0 %v1049
      %v1078 = vpop.f32.mrf.mxu0
      %v1079 = vadd.f32 %v1053, %v1078
      %1080 = vmatmul.f32.gmra.mxu0 %v1050
      %v1081 = vpop.f32.mrf.mxu0
      %v1082 = vadd.f32 %v1053, %v1081
      %1083 = vmatmul.f32.gmra.mxu0 %v1051
      %v1084 = vpop.f32.mrf.mxu0
      %v1085 = vadd.f32 %v1053, %v1084
      %1086 = vdwg.mxu0
      %1087 = vst [vmem:[%s359] sm:$0xff] %v1073
      %1088 = vst [vmem:[%s359 + $0x8] sm:$0xff] %v1076
      %1089 = vst [vmem:[%s359 + $0x10] sm:$0xff] %v1079
      %1090 = vst [vmem:[%s359 + $0x18] sm:$0xff] %v1082
      %1091 = vst [vmem:[%s359 + $0x20] sm:$0xff] %v1085
      %p1092 = scmp.lt.s32.totalorder %s21, 1
      %s1093 = scalar_select %p1092, %s21, 1
      %s1094 = smul.addr %s1093, 5
      %s1095 = smul.addr %s1094, 8
      %s1096 = scalar_lea.vmem %s10, %s1095
      // Predicated region
      $region61: #{_lambda_.1} parent=59 // pred_check
        %p1097 = pneg %p254
      $region62: #{_lambda_.1} parent=59 // pred_check_branch
        %1099 = sbr.rel (%p1097) target = $region64
      $region63: #{_lambda_.1} parent=59 // pred_region
        _
      $region64: #{_lambda_.1} parent=59 // pred_fallthru
        _
    $region60: #{_lambda_.1} parent=5 // pred_fallthru
      _
    %p1100 = scmp.le.s32.totalorder 2, %s16
    // Predicated region
    $region65: #{_lambda_.1} parent=5 // pred_check
      %p1101 = pneg %p1100
    $region66: #{_lambda_.1} parent=5 // pred_check_branch
      %1103 = sbr.rel (%p1101) target = $region68
    $region67: #{_lambda_.1} parent=5 // pred_region
      %s1104 = ssub.s32 %s16, 2
      // Predicated region
      $region69: #{_lambda_.1} parent=67 // pred_check
        %p1105 = pneg %p260
      $region70: #{_lambda_.1} parent=67 // pred_check_branch
        %1107 = sbr.rel (%p1105) target = $region72
      $region71: #{_lambda_.1} parent=67 // pred_region
        %p1108 = scmp.lt.s32.totalorder %s22, 1
        %s1109 = scalar_select %p1108, %s22, 1
        %s1110 = smul.addr %s1109, 5
        %s1111 = smul.addr %s1110, 8
        %s1112 = scalar_lea.vmem %s10, %s1111
      $region72: #{_lambda_.1} parent=67 // pred_fallthru
        _
    $region68: #{_lambda_.1} parent=5 // pred_fallthru
      _
  $region6: #{_lambda_.1} parent=0 // loop_footer
    %s20 = sadd.s32 1, %s16
  $region7: #{_lambda_.1} parent=0 // loop_footer_branch
    %15 = sbr.rel target = $region3
  $region8: #{_lambda_.1} parent=0 // loop_exit
    _

</llo_original>
